<compile_context>
chip_gen: v6e
topology: v6e:2x2x1
jax: 0.10.0
libtpu: 0.0.40
codegen_flags: <defaults>
</compile_context>

<pallas_src>
import functools

import jax
import jax.numpy as jnp
from jax.experimental import pallas as pl
from jax.experimental.pallas import tpu as pltpu


def _round_up(x, m):
    return ((x + m - 1) // m) * m


# ----------------------------------------------------------------------------
# Kernel
# ----------------------------------------------------------------------------
def memnet_kernel(sent_x_ref, aspect_x_ref, posw_ref, slens_ref, alens_ref,
                  watt_wm_ref, watt_wv_ref, watt_b_ref,
                  w_w_ref, w_b_ref, out_w_ref, out_b_ref,
                  logit_ref, *, num_hop):
    # Embeddings arrive as bf16 (halves HBM read of the dominant tensor);
    # upcast once to f32 for compute.
    m = sent_x_ref[...].astype(jnp.float32)            # (TB, L1p, Dp)
    aspect = aspect_x_ref[...].astype(jnp.float32)     # (TB, L2p, Dp)
    posw = posw_ref[...]                               # (TB, L1p) f32, 0 beyond L1
    slens = slens_ref[...]                             # (TB, 1) int32
    inv_alens = pl.reciprocal(alens_ref[...], approx=True)   # (TB, 1)

    watt_wm = watt_wm_ref[...]                         # (1, Dp)  Watt, sentence half
    watt_wv = watt_wv_ref[...]                         # (1, Dp)  Watt, vec half
    watt_b = watt_b_ref[...]                           # (1, 1)
    w_w = w_w_ref[...]                                 # (Dp, Dp) W.weight^T (zero-padded)
    w_b = w_b_ref[...]                                 # (1, Dp)
    out_w = out_w_ref[...]                             # (Dp, Cp) output.weight^T
    out_b = out_b_ref[...]                             # (1, Cp)

    tb, l1p = posw.shape

    # ---- hop-invariant work (hoisted out of the unrolled hop loop) ----------
    # In-sentence mask built in-kernel from sent_lens (no HBM mask array).
    pos = jax.lax.broadcasted_iota(jnp.int32, (tb, l1p), 1)
    mask_f = (pos < slens).astype(jnp.float32)         # (TB, L1p)

    # vec = mean of aspect embeddings (padded aspect rows / lanes are zero).
    vec = jnp.sum(aspect, axis=1) * inv_alens          # (TB, Dp)

    # Watt score contribution of m (+ bias) — m is constant across hops.
    # (Kept on the VPU/XLU: an MXU (TB*L1p,Dp)@(Dp,1) formulation would need a
    #  costly (.,1) -> (TB,L1p) relayout of the result; this runs once per tile.)
    s_m = jnp.sum(m * watt_wm[:, None, :], axis=-1) + watt_b   # (TB, L1p)

    # ---- memory hops ---------------------------------------------------------
    for _ in range(num_hop):
        s_v = jnp.sum(vec * watt_wv, axis=-1, keepdims=True)   # (TB, 1)

        # tanh(.)*posw is bounded, so exp cannot overflow: no -inf fill and no
        # row-max subtraction needed; masked positions are zeroed by mask_f.
        alpha = jnp.tanh(s_m + s_v) * posw                     # (TB, L1p)
        e = jnp.exp(alpha) * mask_f
        denom = jnp.maximum(jnp.sum(e, axis=1, keepdims=True), 1e-20)
        alpha = e * pl.reciprocal(denom, approx=True)          # (TB, L1p)

        # Weighted sum over sentence positions: VPU multiply + sublane reduce.
        # (An M=1 batched MXU matmul here wastes 255/256 of the MXU rows.)
        out = jnp.sum(alpha[:, :, None] * m, axis=1)           # (TB, Dp)

        # vec = W(vec) + out  — real (TB, Dp) @ (Dp, Dp) MXU matmul.
        vec = jnp.dot(vec, w_w, preferred_element_type=jnp.float32) + w_b + out

    logit = jnp.dot(vec, out_w, preferred_element_type=jnp.float32) + out_b
    logit_ref[...] = logit.astype(logit_ref.dtype)             # (TB, Cp) lane-dense


# ----------------------------------------------------------------------------
# Tile sizing (generation aware, (8,128)-tiling aware)
# ----------------------------------------------------------------------------
def _generation_params():
    """VMEM budget / limits / tile caps per TPU generation.

    v7x: 64 MiB VMEM, 2 TensorCores -> conservative budget, keep >= 2 grid
         steps so dimension_semantics=('parallel',) can use both TCs.
    v5e/v6e: 128 MiB VMEM, 1 TC -> big tiles, higher vmem_limit_bytes.
    Unknown/failure -> conservative (v7x-safe) settings.
    """
    vmem = None
    try:
        info = pltpu.get_tpu_info()
        vmem = getattr(info, "vmem_capacity_bytes", None)
    except Exception:
        vmem = None
    if vmem is None or int(vmem) <= (64 << 20):
        return dict(vmem_budget=24 << 20, vmem_limit=48 << 20,
                    max_tb=256, min_grid_steps=2)
    return dict(vmem_budget=64 << 20, vmem_limit=100 << 20,
                max_tb=256, min_grid_steps=1)


def _choose_tb(B, L1p, L2p, Dp, Cp, *, max_tb, vmem_budget_bytes,
               min_grid_steps):
    """Largest batch tile (multiple of 8) whose real, tiling-padded VMEM
    footprint (double-buffered pipeline buffers + f32 compute temporaries +
    double-buffered weights) fits the budget, optionally capped so the grid
    has >= min_grid_steps tiles (v7x megacore)."""
    b8 = _round_up(B, 8)
    tb = max(8, (min(max_tb, b8) // 8) * 8)
    if min_grid_steps > 1 and b8 >= 8 * min_grid_steps:
        tb = min(tb, max(8, (b8 // min_grid_steps // 8) * 8))

    def pad2d_bytes(rows, cols, itemsize):
        sub = 16 if itemsize == 2 else 8
        return _round_up(max(rows, 1), sub) * _round_up(max(cols, 1), 128) * itemsize

    # Weights: double-buffered f32 (constant index_map, fetched once but
    # allocated twice by the pipeline).
    weight_bytes = 2 * (pad2d_bytes(1, Dp, 4) * 3          # watt_wm, watt_wv, w_b
                        + pad2d_bytes(1, 1, 4)             # watt_b
                        + pad2d_bytes(Dp, Dp, 4)           # w_w
                        + pad2d_bytes(Dp, Cp, 4)           # out_w
                        + pad2d_bytes(1, Cp, 4))           # out_b

    def tile_bytes(t):
        sent = t * _round_up(L1p, 16) * Dp * 2             # bf16 (TB, L1p, Dp)
        asp = t * _round_up(L2p, 16) * Dp * 2              # bf16 (TB, L2p, Dp)
        posw = pad2d_bytes(t, L1p, 4)
        lens = 2 * pad2d_bytes(t, 1, 4)
        logits = pad2d_bytes(t, Cp, 4)
        dbuf = 2 * (sent + asp + posw + lens + logits)     # double-buffered
        # f32 compute temporaries: m/aspect upcasts + per-hop alpha*m product.
        temps = 3 * t * _round_up(L1p, 8) * Dp * 4 + t * _round_up(L2p, 8) * Dp * 4
        return dbuf + temps + weight_bytes

    while tb > 8 and tile_bytes(tb) > vmem_budget_bytes:
        tb -= 8
    return tb


# ----------------------------------------------------------------------------
# Wrapper
# ----------------------------------------------------------------------------
def memnet_forward(params, sent_ids, aspect_ids, sent_lens, aspect_lens,
                   position_weights, *, num_hop):
    wordmat = params["wordmat"]
    B, L1 = sent_ids.shape
    L2 = aspect_ids.shape[1]
    D = wordmat.shape[1]
    C = params["out_b"].shape[1]

    # Lane/sublane-friendly padded sizes.
    L1p = _round_up(L1, 8)
    L2p = _round_up(L2, 8)
    Dp = _round_up(D, 128)
    Cp = _round_up(C, 128)

    gen = _generation_params()
    tb = _choose_tb(B, L1p, L2p, Dp, Cp,
                    max_tb=gen["max_tb"],
                    vmem_budget_bytes=gen["vmem_budget"],
                    min_grid_steps=gen["min_grid_steps"])
    b_pad = _round_up(B, tb)
    pad_b = b_pad - B

    # Embedding gather (data-dependent) stays in XLA; cross HBM in bf16.
    # TODO(synk): fuse the gather into the kernel with scalar-prefetched ids +
    # manual make_async_copy row DMAs from wordmat to remove the write+re-read.
    wordmat_bf = jnp.pad(wordmat.astype(jnp.bfloat16), ((0, 0), (0, Dp - D)))
    sent_x = jnp.take(wordmat_bf, sent_ids, axis=0)        # (B, L1, Dp) bf16
    aspect_x = jnp.take(wordmat_bf, aspect_ids, axis=0)    # (B, L2, Dp) bf16

    posw = position_weights.astype(jnp.float32)
    slens = sent_lens.astype(jnp.int32)
    alens = aspect_lens.astype(jnp.float32)

    sent_x = jnp.pad(sent_x, ((0, pad_b), (0, L1p - L1), (0, 0)))
    aspect_x = jnp.pad(aspect_x, ((0, pad_b), (0, L2p - L2), (0, 0)))
    posw = jnp.pad(posw, ((0, pad_b), (0, L1p - L1)))
    slens = jnp.pad(slens, (0, pad_b), constant_values=1)[:, None]     # finite pads
    alens = jnp.pad(alens, (0, pad_b), constant_values=1.0)[:, None]

    # Zero-pad weights to lane-dense sizes; padded lanes stay zero every hop,
    # so results are unchanged.
    watt_wm = jnp.pad(params["watt_wm"], ((0, 0), (0, Dp - D)))
    watt_wv = jnp.pad(params["watt_wv"], ((0, 0), (0, Dp - D)))
    watt_b = params["watt_b"]
    w_w = jnp.pad(params["w_w"], ((0, Dp - D), (0, Dp - D)))
    w_b = jnp.pad(params["w_b"], ((0, 0), (0, Dp - D)))
    out_w = jnp.pad(params["out_w"], ((0, Dp - D), (0, Cp - C)))
    out_b = jnp.pad(params["out_b"], ((0, 0), (0, Cp - C)))

    kernel = functools.partial(memnet_kernel, num_hop=num_hop)
    grid = (b_pad // tb,)

    tile3 = lambda n: pl.BlockSpec((tb, n, Dp), lambda b: (b, 0, 0))
    tile2 = lambda n: pl.BlockSpec((tb, n), lambda b: (b, 0))
    shared = lambda r, c: pl.BlockSpec((r, c), lambda b: (0, 0))

    logits = pl.pallas_call(
        kernel,
        out_shape=jax.ShapeDtypeStruct((b_pad, Cp), jnp.float32),
        grid=grid,
        in_specs=[
            tile3(L1p),        # sentence embeddings (bf16)
            tile3(L2p),        # aspect embeddings (bf16)
            tile2(L1p),        # position weights
            tile2(1),          # sentence lengths
            tile2(1),          # aspect lengths
            shared(1, Dp),     # Watt weight, sentence half
            shared(1, Dp),     # Watt weight, vec half
            shared(1, 1),      # Watt bias
            shared(Dp, Dp),    # W.weight^T
            shared(1, Dp),     # W bias
            shared(Dp, Cp),    # output.weight^T
            shared(1, Cp),     # output bias
        ],
        out_specs=tile2(Cp),
        compiler_params=pltpu.CompilerParams(
            dimension_semantics=("parallel",),
            vmem_limit_bytes=gen["vmem_limit"]),
    )(sent_x, aspect_x, posw, slens, alens,
      watt_wm, watt_wv, watt_b, w_w, w_b, out_w, out_b)
    return logits[:B, :C]


# ----------------------------------------------------------------------------
# Pure-JAX reference (mirror of the PyTorch forward) + params
# ----------------------------------------------------------------------------
def memnet_reference(params, sent_ids, aspect_ids, sent_lens, aspect_lens,
                     position_weights, *, num_hop):
    wordmat = params["wordmat"]
    B, L1 = sent_ids.shape
    sent_x = jnp.take(wordmat, sent_ids, axis=0)
    aspect_x = jnp.take(wordmat, aspect_ids, axis=0)
    mask = (jnp.arange(L1)[None, :] < sent_lens[:, None]).astype(jnp.float32)
    vec = jnp.sum(aspect_x, axis=1) / aspect_lens.astype(jnp.float32)[:, None]
    m = sent_x
    for _ in range(num_hop):
        s = (jnp.sum(m * params["watt_wm"][:, None, :], axis=-1)
             + jnp.sum(vec * params["watt_wv"], axis=-1, keepdims=True)
             + params["watt_b"])
        alpha = jnp.tanh(s) * position_weights
        alpha = jnp.where(mask > 0, alpha, -1e30)
        alpha = alpha - jnp.max(alpha, axis=1, keepdims=True)
        e = jnp.exp(alpha) * mask
        alpha = e / jnp.sum(e, axis=1, keepdims=True)
        out = jnp.sum(alpha[:, :, None] * m, axis=1)
        vec = vec @ params["w_w"] + params["w_b"] + out
    return vec @ params["out_w"] + params["out_b"]


def init_params(key, vocab, dim_word, num_class):
    ks = jax.random.split(key, 8)
    s = 0.1
    return {
        "wordmat": jax.random.normal(ks[0], (vocab, dim_word), jnp.float32) * s,
        "watt_wm": jax.random.normal(ks[1], (1, dim_word), jnp.float32) * s,
        "watt_wv": jax.random.normal(ks[2], (1, dim_word), jnp.float32) * s,
        "watt_b":  jax.random.normal(ks[3], (1, 1), jnp.float32) * s,
        "w_w":     jax.random.normal(ks[4], (dim_word, dim_word), jnp.float32) * s,
        "w_b":     jax.random.normal(ks[5], (1, dim_word), jnp.float32) * s,
        "out_w":   jax.random.normal(ks[6], (dim_word, num_class), jnp.float32) * s,
        "out_b":   jax.random.normal(ks[7], (1, num_class), jnp.float32) * s,
    }


if __name__ == "__main__":
    B, L1, L2 = 2, 8, 4
    VOCAB, D, C = 50, 32, 3
    NUM_HOP = 3

    key = jax.random.PRNGKey(0)
    k_param, k_s, k_a, k_p = jax.random.split(key, 4)

    params = init_params(k_param, VOCAB, D, C)
    sent_ids = jax.random.randint(k_s, (B, L1), 0, VOCAB, dtype=jnp.int32)
    aspect_ids = jax.random.randint(k_a, (B, L2), 0, VOCAB, dtype=jnp.int32)
    sent_lens = jnp.array([8, 5], dtype=jnp.int32)
    aspect_lens = jnp.array([4, 2], dtype=jnp.int32)
    position_weights = jax.random.uniform(k_p, (B, L1), jnp.float32)

    logit = memnet_forward(params, sent_ids, aspect_ids, sent_lens,
                           aspect_lens, position_weights, num_hop=NUM_HOP)
    jax.block_until_ready(logit)

    ref = memnet_reference(params, sent_ids, aspect_ids, sent_lens,
                           aspect_lens, position_weights, num_hop=NUM_HOP)
    assert logit.shape == (B, C)
    # bf16 embeddings + pl.reciprocal(approx=True) trade a small amount of
    # accuracy for HBM bandwidth / EUP throughput -> compare at a loosened
    # tolerance vs. the exact-f32 reference.
    assert jnp.allclose(logit, ref, atol=2e-2, rtol=2e-2), (
        float(jnp.max(jnp.abs(logit - ref))))

    print("KERNEL_OK")
</pallas_src>

<mosaic_0001>
module attributes {stable_mosaic.version = 11 : i64} {
  func.func @memnet_kernel(%arg0: i32, %arg1: memref<8x8x128xbf16, #tpu.memory_space<vmem>>, %arg2: memref<8x8x128xbf16, #tpu.memory_space<vmem>>, %arg3: memref<8x8xf32, #tpu.memory_space<vmem>>, %arg4: memref<8x1xi32, #tpu.memory_space<vmem>>, %arg5: memref<8x1xf32, #tpu.memory_space<vmem>>, %arg6: memref<1x128xf32, #tpu.memory_space<vmem>>, %arg7: memref<1x128xf32, #tpu.memory_space<vmem>>, %arg8: memref<1x1xf32, #tpu.memory_space<vmem>>, %arg9: memref<128x128xf32, #tpu.memory_space<vmem>>, %arg10: memref<1x128xf32, #tpu.memory_space<vmem>>, %arg11: memref<128x128xf32, #tpu.memory_space<vmem>>, %arg12: memref<1x128xf32, #tpu.memory_space<vmem>>, %arg13: memref<8x128xf32, #tpu.memory_space<vmem>>) attributes {dimension_semantics = [#tpu.dimension_semantics<parallel>], iteration_bounds = array<i64: 1>, scalar_prefetch = 0 : i64, scratch_operands = 0 : i64, tpu.core_type = #tpu.core_type<tc>, window_params = [{transform_indices = @transform_0, window_bounds = array<i64: 8, 8, 128>}, {transform_indices = @transform_1, window_bounds = array<i64: 8, 8, 128>}, {transform_indices = @transform_2, window_bounds = array<i64: 8, 8>}, {transform_indices = @transform_3, window_bounds = array<i64: 8, 1>}, {transform_indices = @transform_4, window_bounds = array<i64: 8, 1>}, {pipeline_mode = #tpu.pipeline_mode<synchronous>, transform_indices = @transform_5, window_bounds = array<i64: 1, 128>}, {pipeline_mode = #tpu.pipeline_mode<synchronous>, transform_indices = @transform_6, window_bounds = array<i64: 1, 128>}, {pipeline_mode = #tpu.pipeline_mode<synchronous>, transform_indices = @transform_7, window_bounds = array<i64: 1, 1>}, {pipeline_mode = #tpu.pipeline_mode<synchronous>, transform_indices = @transform_8, window_bounds = array<i64: 128, 128>}, {pipeline_mode = #tpu.pipeline_mode<synchronous>, transform_indices = @transform_9, window_bounds = array<i64: 1, 128>}, {pipeline_mode = #tpu.pipeline_mode<synchronous>, transform_indices = @transform_10, window_bounds = array<i64: 128, 128>}, {pipeline_mode = #tpu.pipeline_mode<synchronous>, transform_indices = @transform_11, window_bounds = array<i64: 1, 128>}, {transform_indices = @transform_12, window_bounds = array<i64: 8, 128>}]} {
    %c0 = arith.constant 0 : index
    %c0_0 = arith.constant 0 : index
    %c0_1 = arith.constant 0 : index
    %0 = vector.load %arg1[%c0, %c0_0, %c0_1] : memref<8x8x128xbf16, #tpu.memory_space<vmem>>, vector<8x8x128xbf16>
    %1 = arith.extf %0 : vector<8x8x128xbf16> to vector<8x8x128xf32>
    %c0_2 = arith.constant 0 : index
    %c0_3 = arith.constant 0 : index
    %c0_4 = arith.constant 0 : index
    %2 = vector.load %arg2[%c0_2, %c0_3, %c0_4] : memref<8x8x128xbf16, #tpu.memory_space<vmem>>, vector<8x8x128xbf16>
    %3 = arith.extf %2 : vector<8x8x128xbf16> to vector<8x8x128xf32>
    %c0_5 = arith.constant 0 : index
    %c0_6 = arith.constant 0 : index
    %4 = vector.load %arg3[%c0_5, %c0_6] : memref<8x8xf32, #tpu.memory_space<vmem>>, vector<8x8xf32>
    %c0_7 = arith.constant 0 : index
    %c0_8 = arith.constant 0 : index
    %5 = vector.load %arg4[%c0_7, %c0_8] : memref<8x1xi32, #tpu.memory_space<vmem>>, vector<8x1xi32>
    %c0_9 = arith.constant 0 : index
    %c0_10 = arith.constant 0 : index
    %6 = vector.load %arg5[%c0_9, %c0_10] : memref<8x1xf32, #tpu.memory_space<vmem>>, vector<8x1xf32>
    %7 = tpu.reciprocal %6 {approx = true} : vector<8x1xf32> -> vector<8x1xf32>
    %c0_11 = arith.constant 0 : index
    %c0_12 = arith.constant 0 : index
    %8 = vector.load %arg6[%c0_11, %c0_12] : memref<1x128xf32, #tpu.memory_space<vmem>>, vector<1x128xf32>
    %c0_13 = arith.constant 0 : index
    %c0_14 = arith.constant 0 : index
    %9 = vector.load %arg7[%c0_13, %c0_14] : memref<1x128xf32, #tpu.memory_space<vmem>>, vector<1x128xf32>
    %c0_15 = arith.constant 0 : index
    %c0_16 = arith.constant 0 : index
    %10 = vector.load %arg8[%c0_15, %c0_16] : memref<1x1xf32, #tpu.memory_space<vmem>>, vector<1x1xf32>
    %c0_17 = arith.constant 0 : index
    %c0_18 = arith.constant 0 : index
    %11 = vector.load %arg9[%c0_17, %c0_18] : memref<128x128xf32, #tpu.memory_space<vmem>>, vector<128x128xf32>
    %c0_19 = arith.constant 0 : index
    %c0_20 = arith.constant 0 : index
    %12 = vector.load %arg10[%c0_19, %c0_20] : memref<1x128xf32, #tpu.memory_space<vmem>>, vector<1x128xf32>
    %c0_21 = arith.constant 0 : index
    %c0_22 = arith.constant 0 : index
    %13 = vector.load %arg11[%c0_21, %c0_22] : memref<128x128xf32, #tpu.memory_space<vmem>>, vector<128x128xf32>
    %c0_23 = arith.constant 0 : index
    %c0_24 = arith.constant 0 : index
    %14 = vector.load %arg12[%c0_23, %c0_24] : memref<1x128xf32, #tpu.memory_space<vmem>>, vector<1x128xf32>
    %15 = tpu.iota {dimensions = array<i32: 1>} : vector<8x8xi32>
    %16 = vector.broadcast %5 : vector<8x1xi32> to vector<8x8xi32>
    %17 = arith.cmpi slt, %15, %16 : vector<8x8xi32>
    %18 = arith.extui %17 : vector<8x8xi1> to vector<8x8xi32>
    %19 = arith.sitofp %18 : vector<8x8xi32> to vector<8x8xf32>
    %cst = arith.constant dense<0.000000e+00> : vector<8x128xf32>
    %20 = vector.multi_reduction <add>, %3, %cst [1] : vector<8x8x128xf32> to vector<8x128xf32>
    %21 = vector.broadcast %7 : vector<8x1xf32> to vector<8x128xf32>
    %22 = arith.mulf %20, %21 : vector<8x128xf32>
    %23 = vector.shape_cast %8 : vector<1x128xf32> to vector<1x1x128xf32>
    %24 = vector.broadcast %23 : vector<1x1x128xf32> to vector<8x8x128xf32>
    %25 = arith.mulf %1, %24 : vector<8x8x128xf32>
    %cst_25 = arith.constant dense<0.000000e+00> : vector<8x8xf32>
    %26 = vector.multi_reduction <add>, %25, %cst_25 [2] : vector<8x8x128xf32> to vector<8x8xf32>
    %27 = vector.broadcast %10 : vector<1x1xf32> to vector<8x8xf32>
    %28 = arith.addf %26, %27 : vector<8x8xf32>
    %29 = vector.broadcast %9 : vector<1x128xf32> to vector<8x128xf32>
    %30 = arith.mulf %22, %29 : vector<8x128xf32>
    %cst_26 = arith.constant dense<0.000000e+00> : vector<8xf32>
    %31 = vector.multi_reduction <add>, %30, %cst_26 [1] : vector<8x128xf32> to vector<8xf32>
    %32 = vector.shape_cast %31 : vector<8xf32> to vector<8x1xf32>
    %33 = vector.broadcast %32 : vector<8x1xf32> to vector<8x8xf32>
    %34 = arith.addf %28, %33 : vector<8x8xf32>
    %35 = math.tanh %34 : vector<8x8xf32>
    %36 = arith.mulf %35, %4 : vector<8x8xf32>
    %37 = math.exp %36 : vector<8x8xf32>
    %38 = arith.mulf %37, %19 : vector<8x8xf32>
    %cst_27 = arith.constant dense<0.000000e+00> : vector<8xf32>
    %39 = vector.multi_reduction <add>, %38, %cst_27 [1] : vector<8x8xf32> to vector<8xf32>
    %40 = vector.shape_cast %39 : vector<8xf32> to vector<8x1xf32>
    %cst_28 = arith.constant 9.99999968E-21 : f32
    %41 = vector.broadcast %cst_28 : f32 to vector<8x1xf32>
    %42 = arith.maximumf %40, %41 : vector<8x1xf32>
    %43 = tpu.reciprocal %42 {approx = true} : vector<8x1xf32> -> vector<8x1xf32>
    %44 = vector.broadcast %43 : vector<8x1xf32> to vector<8x8xf32>
    %45 = arith.mulf %38, %44 : vector<8x8xf32>
    %46 = vector.shape_cast %45 : vector<8x8xf32> to vector<8x8x1xf32>
    %47 = vector.broadcast %46 : vector<8x8x1xf32> to vector<8x8x128xf32>
    %48 = arith.mulf %47, %1 : vector<8x8x128xf32>
    %cst_29 = arith.constant dense<0.000000e+00> : vector<8x128xf32>
    %49 = vector.multi_reduction <add>, %48, %cst_29 [1] : vector<8x8x128xf32> to vector<8x128xf32>
    %cst_30 = arith.constant dense<0.000000e+00> : vector<8x128xf32>
    %50 = tpu.matmul %22, %11, %cst_30 {dimension_numbers = #tpu.dot_dimension_numbers<[1], [0], [0], [1], [0, 0, 1, 1], [], []>} : vector<8x128xf32>, vector<128x128xf32>, vector<8x128xf32> -> vector<8x128xf32>
    %51 = vector.broadcast %12 : vector<1x128xf32> to vector<8x128xf32>
    %52 = arith.addf %50, %51 : vector<8x128xf32>
    %53 = arith.addf %52, %49 : vector<8x128xf32>
    %54 = vector.broadcast %9 : vector<1x128xf32> to vector<8x128xf32>
    %55 = arith.mulf %53, %54 : vector<8x128xf32>
    %cst_31 = arith.constant dense<0.000000e+00> : vector<8xf32>
    %56 = vector.multi_reduction <add>, %55, %cst_31 [1] : vector<8x128xf32> to vector<8xf32>
    %57 = vector.shape_cast %56 : vector<8xf32> to vector<8x1xf32>
    %58 = vector.broadcast %57 : vector<8x1xf32> to vector<8x8xf32>
    %59 = arith.addf %28, %58 : vector<8x8xf32>
    %60 = math.tanh %59 : vector<8x8xf32>
    %61 = arith.mulf %60, %4 : vector<8x8xf32>
    %62 = math.exp %61 : vector<8x8xf32>
    %63 = arith.mulf %62, %19 : vector<8x8xf32>
    %cst_32 = arith.constant dense<0.000000e+00> : vector<8xf32>
    %64 = vector.multi_reduction <add>, %63, %cst_32 [1] : vector<8x8xf32> to vector<8xf32>
    %65 = vector.shape_cast %64 : vector<8xf32> to vector<8x1xf32>
    %cst_33 = arith.constant 9.99999968E-21 : f32
    %66 = vector.broadcast %cst_33 : f32 to vector<8x1xf32>
    %67 = arith.maximumf %65, %66 : vector<8x1xf32>
    %68 = tpu.reciprocal %67 {approx = true} : vector<8x1xf32> -> vector<8x1xf32>
    %69 = vector.broadcast %68 : vector<8x1xf32> to vector<8x8xf32>
    %70 = arith.mulf %63, %69 : vector<8x8xf32>
    %71 = vector.shape_cast %70 : vector<8x8xf32> to vector<8x8x1xf32>
    %72 = vector.broadcast %71 : vector<8x8x1xf32> to vector<8x8x128xf32>
    %73 = arith.mulf %72, %1 : vector<8x8x128xf32>
    %cst_34 = arith.constant dense<0.000000e+00> : vector<8x128xf32>
    %74 = vector.multi_reduction <add>, %73, %cst_34 [1] : vector<8x8x128xf32> to vector<8x128xf32>
    %cst_35 = arith.constant dense<0.000000e+00> : vector<8x128xf32>
    %75 = tpu.matmul %53, %11, %cst_35 {dimension_numbers = #tpu.dot_dimension_numbers<[1], [0], [0], [1], [0, 0, 1, 1], [], []>} : vector<8x128xf32>, vector<128x128xf32>, vector<8x128xf32> -> vector<8x128xf32>
    %76 = vector.broadcast %12 : vector<1x128xf32> to vector<8x128xf32>
    %77 = arith.addf %75, %76 : vector<8x128xf32>
    %78 = arith.addf %77, %74 : vector<8x128xf32>
    %79 = vector.broadcast %9 : vector<1x128xf32> to vector<8x128xf32>
    %80 = arith.mulf %78, %79 : vector<8x128xf32>
    %cst_36 = arith.constant dense<0.000000e+00> : vector<8xf32>
    %81 = vector.multi_reduction <add>, %80, %cst_36 [1] : vector<8x128xf32> to vector<8xf32>
    %82 = vector.shape_cast %81 : vector<8xf32> to vector<8x1xf32>
    %83 = vector.broadcast %82 : vector<8x1xf32> to vector<8x8xf32>
    %84 = arith.addf %28, %83 : vector<8x8xf32>
    %85 = math.tanh %84 : vector<8x8xf32>
    %86 = arith.mulf %85, %4 : vector<8x8xf32>
    %87 = math.exp %86 : vector<8x8xf32>
    %88 = arith.mulf %87, %19 : vector<8x8xf32>
    %cst_37 = arith.constant dense<0.000000e+00> : vector<8xf32>
    %89 = vector.multi_reduction <add>, %88, %cst_37 [1] : vector<8x8xf32> to vector<8xf32>
    %90 = vector.shape_cast %89 : vector<8xf32> to vector<8x1xf32>
    %cst_38 = arith.constant 9.99999968E-21 : f32
    %91 = vector.broadcast %cst_38 : f32 to vector<8x1xf32>
    %92 = arith.maximumf %90, %91 : vector<8x1xf32>
    %93 = tpu.reciprocal %92 {approx = true} : vector<8x1xf32> -> vector<8x1xf32>
    %94 = vector.broadcast %93 : vector<8x1xf32> to vector<8x8xf32>
    %95 = arith.mulf %88, %94 : vector<8x8xf32>
    %96 = vector.shape_cast %95 : vector<8x8xf32> to vector<8x8x1xf32>
    %97 = vector.broadcast %96 : vector<8x8x1xf32> to vector<8x8x128xf32>
    %98 = arith.mulf %97, %1 : vector<8x8x128xf32>
    %cst_39 = arith.constant dense<0.000000e+00> : vector<8x128xf32>
    %99 = vector.multi_reduction <add>, %98, %cst_39 [1] : vector<8x8x128xf32> to vector<8x128xf32>
    %cst_40 = arith.constant dense<0.000000e+00> : vector<8x128xf32>
    %100 = tpu.matmul %78, %11, %cst_40 {dimension_numbers = #tpu.dot_dimension_numbers<[1], [0], [0], [1], [0, 0, 1, 1], [], []>} : vector<8x128xf32>, vector<128x128xf32>, vector<8x128xf32> -> vector<8x128xf32>
    %101 = vector.broadcast %12 : vector<1x128xf32> to vector<8x128xf32>
    %102 = arith.addf %100, %101 : vector<8x128xf32>
    %103 = arith.addf %102, %99 : vector<8x128xf32>
    %cst_41 = arith.constant dense<0.000000e+00> : vector<8x128xf32>
    %104 = tpu.matmul %103, %13, %cst_41 {dimension_numbers = #tpu.dot_dimension_numbers<[1], [0], [0], [1], [0, 0, 1, 1], [], []>} : vector<8x128xf32>, vector<128x128xf32>, vector<8x128xf32> -> vector<8x128xf32>
    %105 = vector.broadcast %14 : vector<1x128xf32> to vector<8x128xf32>
    %106 = arith.addf %104, %105 : vector<8x128xf32>
    %c0_42 = arith.constant 0 : index
    %c0_43 = arith.constant 0 : index
    %107 = vector.load %arg13[%c0_42, %c0_43] : memref<8x128xf32, #tpu.memory_space<vmem>>, vector<8x128xf32>
    tpu.vector_store %arg13[%c0_42, %c0_43], %106 {strides = array<i32>} : memref<8x128xf32, #tpu.memory_space<vmem>>, vector<8x128xf32>,
    return
  }
  func.func @transform_0(%arg0: i32) -> (i32, i32, i32) {
    %c0_i32 = arith.constant 0 : i32
    %c0_i32_0 = arith.constant 0 : i32
    %c0_i32_1 = arith.constant 0 : i32
    return %arg0, %c0_i32, %c0_i32_0 : i32, i32, i32
  }
  func.func @transform_1(%arg0: i32) -> (i32, i32, i32) {
    %c0_i32 = arith.constant 0 : i32
    %c0_i32_0 = arith.constant 0 : i32
    %c0_i32_1 = arith.constant 0 : i32
    return %arg0, %c0_i32, %c0_i32_0 : i32, i32, i32
  }
  func.func @transform_2(%arg0: i32) -> (i32, i32) {
    %c0_i32 = arith.constant 0 : i32
    %c0_i32_0 = arith.constant 0 : i32
    return %arg0, %c0_i32 : i32, i32
  }
  func.func @transform_3(%arg0: i32) -> (i32, i32) {
    %c0_i32 = arith.constant 0 : i32
    %c0_i32_0 = arith.constant 0 : i32
    return %arg0, %c0_i32 : i32, i32
  }
  func.func @transform_4(%arg0: i32) -> (i32, i32) {
    %c0_i32 = arith.constant 0 : i32
    %c0_i32_0 = arith.constant 0 : i32
    return %arg0, %c0_i32 : i32, i32
  }
  func.func @transform_5(%arg0: i32) -> (i32, i32) {
    %c0_i32 = arith.constant 0 : i32
    %c0_i32_0 = arith.constant 0 : i32
    %c0_i32_1 = arith.constant 0 : i32
    return %c0_i32, %c0_i32_0 : i32, i32
  }
  func.func @transform_6(%arg0: i32) -> (i32, i32) {
    %c0_i32 = arith.constant 0 : i32
    %c0_i32_0 = arith.constant 0 : i32
    %c0_i32_1 = arith.constant 0 : i32
    return %c0_i32, %c0_i32_0 : i32, i32
  }
  func.func @transform_7(%arg0: i32) -> (i32, i32) {
    %c0_i32 = arith.constant 0 : i32
    %c0_i32_0 = arith.constant 0 : i32
    %c0_i32_1 = arith.constant 0 : i32
    return %c0_i32, %c0_i32_0 : i32, i32
  }
  func.func @transform_8(%arg0: i32) -> (i32, i32) {
    %c0_i32 = arith.constant 0 : i32
    %c0_i32_0 = arith.constant 0 : i32
    %c0_i32_1 = arith.constant 0 : i32
    return %c0_i32, %c0_i32_0 : i32, i32
  }
  func.func @transform_9(%arg0: i32) -> (i32, i32) {
    %c0_i32 = arith.constant 0 : i32
    %c0_i32_0 = arith.constant 0 : i32
    %c0_i32_1 = arith.constant 0 : i32
    return %c0_i32, %c0_i32_0 : i32, i32
  }
  func.func @transform_10(%arg0: i32) -> (i32, i32) {
    %c0_i32 = arith.constant 0 : i32
    %c0_i32_0 = arith.constant 0 : i32
    %c0_i32_1 = arith.constant 0 : i32
    return %c0_i32, %c0_i32_0 : i32, i32
  }
  func.func @transform_11(%arg0: i32) -> (i32, i32) {
    %c0_i32 = arith.constant 0 : i32
    %c0_i32_0 = arith.constant 0 : i32
    %c0_i32_1 = arith.constant 0 : i32
    return %c0_i32, %c0_i32_0 : i32, i32
  }
  func.func @transform_12(%arg0: i32) -> (i32, i32) {
    %c0_i32 = arith.constant 0 : i32
    %c0_i32_0 = arith.constant 0 : i32
    return %arg0, %c0_i32 : i32, i32
  }
}

</mosaic_0001>

<llo_original>
// kernel: tpu_custom_call.1
$region0: #{tpu_custom_call.1}
  #allocation0 [shape = 'u32[]', space=smem, size = 0x4, offset = 0x4, fixed_abs, tag = 'smem constant byte address 0x4 - core index']
  #allocation1 [shape = 'u32[144,128]{1,0:T(1,128)}', space=vmem, size = 0x12000, scoped, tag = 'internal scratch']
  #allocation2 [shape = 'f32[1,1]{1,0:T(1,128)S(1)}', space=vmem, size = 0x200, scoped, tag = 'scoped memory for tpu_custom_call.1']
  %s0 = inlined_call_operand.hbm [shape: bf16[8,8,128], index: 0, kind: input, shape index: {}]
  %s1 = inlined_call_operand.hbm [shape: bf16[8,8,128], index: 1, kind: input, shape index: {}]
  %s2 = inlined_call_operand.vmem [shape: f32[8,8], index: 2, kind: input, shape index: {}]
  %s3 = inlined_call_operand.vmem [shape: s32[8,1], index: 3, kind: input, shape index: {}]
  %s4 = inlined_call_operand.vmem [shape: f32[8,1], index: 4, kind: input, shape index: {}]
  %s5 = inlined_call_operand.vmem [shape: f32[1,128], index: 5, kind: input, shape index: {}]
  %s6 = inlined_call_operand.vmem [shape: f32[1,128], index: 6, kind: input, shape index: {}]
  %s7 = inlined_call_operand.<no memory space> [shape: f32[1,1], index: 7, kind: input, shape index: {}]
  %s8 = inlined_call_operand.hbm [shape: f32[128,128], index: 8, kind: input, shape index: {}]
  %s9 = inlined_call_operand.vmem [shape: f32[1,128], index: 9, kind: input, shape index: {}]
  %s10 = inlined_call_operand.hbm [shape: f32[128,128], index: 10, kind: input, shape index: {}]
  %s11 = inlined_call_operand.vmem [shape: f32[1,128], index: 11, kind: input, shape index: {}]
  %s12 = inlined_call_operand.hbm [shape: f32[8,128], index: 12, kind: output, shape index: {}]
  %s13 = sld [smem:[#allocation0]]
  $region74: #{tpu_custom_call.1} parent=0
    _
  %s15 = ssub.s32 1, %s13
  %s16 = scalar_select 0, %s15, %s13
  %v17 = vstv %s7
  %18 = vst [vmem:[#allocation2] sm:$0x1] %v17
  $region1: #{tpu_custom_call.1} parent=0
    #allocation3 [shape = 'u8[16384]{0}', space=vmem, size = 0x4000, scoped, tag = 'input window, operand 0, single buffered']
    #allocation4 [shape = 's32[1]{0}', space=sflag, size = 0x4, scoped, tag = 'scoped memory for tpu_custom_call.1']
    #allocation5 [shape = 's32[1]{0}', space=sflag, size = 0x4, scoped, tag = 'scoped memory for tpu_custom_call.1']
    #allocation6 [shape = 'u8[16384]{0}', space=vmem, size = 0x4000, scoped, tag = 'input window, operand 1, single buffered']
    #allocation7 [shape = 's32[1]{0}', space=sflag, size = 0x4, scoped, tag = 'scoped memory for tpu_custom_call.1']
    #allocation8 [shape = 'u8[65536]{0}', space=vmem, size = 0x10000, scoped, tag = 'input window, operand 8, single buffered']
    #allocation9 [shape = 'u8[65536]{0}', space=vmem, size = 0x10000, scoped, tag = 'input window, operand 10, single buffered']
    #allocation10 [shape = 's32[1]{0}', space=sflag, size = 0x4, scoped, tag = 'scoped memory for tpu_custom_call.1']
    #allocation11 [shape = 'u8[4096]{0}', space=vmem, size = 0x1000, scoped, tag = 'output window, operand 0, single buffered']
    %19 = vsyncpa [#allocation4], 0
    %20 = vsyncpa [#allocation7], 0
    %21 = vsyncpa [#allocation10], 0
    %22 = vsyncpa [#allocation5], 0
    // Predicated region
    $region2: #{tpu_custom_call.1} parent=1 // pred_check
      _
    $region3: #{tpu_custom_call.1} parent=1 // pred_check_branch
      %24 = sbr.rel (0) target = $region5
    $region4: #{tpu_custom_call.1} parent=1 // pred_region
      %s26 = ssub.s32 512, 512
      %27 = vsyncadd [#allocation4], %s26
      %s28 = sshll.u32 [#allocation3], 4
      %s29 = int_to_ptr.vmem [resolvable:$true] %s28
      %34 = dma.hbm_to_vmem [thread:$0]  %s0, 512, %s29, [#allocation4], 64, 64, 4
    $region5: #{tpu_custom_call.1} parent=1 // pred_fallthru
      _
    // Predicated region
    $region6: #{tpu_custom_call.1} parent=1 // pred_check
      _
    $region7: #{tpu_custom_call.1} parent=1 // pred_check_branch
      %36 = sbr.rel (0) target = $region9
    $region8: #{tpu_custom_call.1} parent=1 // pred_region
      %s38 = ssub.s32 512, 512
      %39 = vsyncadd [#allocation7], %s38
      %s40 = sshll.u32 [#allocation6], 4
      %s41 = int_to_ptr.vmem [resolvable:$true] %s40
      %46 = dma.hbm_to_vmem [thread:$0]  %s1, 512, %s41, [#allocation7], 64, 64, 4
    $region9: #{tpu_custom_call.1} parent=1 // pred_fallthru
      _
    // Predicated region
    $region10: #{tpu_custom_call.1} parent=1 // pred_check
      _
    $region11: #{tpu_custom_call.1} parent=1 // pred_check_branch
      %48 = sbr.rel (0) target = $region13
    $region12: #{tpu_custom_call.1} parent=1 // pred_region
      _
    $region13: #{tpu_custom_call.1} parent=1 // pred_fallthru
      _
    // Predicated region
    $region14: #{tpu_custom_call.1} parent=1 // pred_check
      _
    $region15: #{tpu_custom_call.1} parent=1 // pred_check_branch
      %50 = sbr.rel (0) target = $region17
    $region16: #{tpu_custom_call.1} parent=1 // pred_region
      _
    $region17: #{tpu_custom_call.1} parent=1 // pred_fallthru
      _
    // Predicated region
    $region18: #{tpu_custom_call.1} parent=1 // pred_check
      _
    $region19: #{tpu_custom_call.1} parent=1 // pred_check_branch
      %52 = sbr.rel (0) target = $region21
    $region20: #{tpu_custom_call.1} parent=1 // pred_region
      _
    $region21: #{tpu_custom_call.1} parent=1 // pred_fallthru
      _
    // Predicated region
    $region22: #{tpu_custom_call.1} parent=1 // pred_check
      _
    $region23: #{tpu_custom_call.1} parent=1 // pred_check_branch
      %54 = sbr.rel (0) target = $region25
    $region24: #{tpu_custom_call.1} parent=1 // pred_region
      _
    $region25: #{tpu_custom_call.1} parent=1 // pred_fallthru
      _
    // Predicated region
    $region26: #{tpu_custom_call.1} parent=1 // pred_check
      _
    $region27: #{tpu_custom_call.1} parent=1 // pred_check_branch
      %56 = sbr.rel (0) target = $region29
    $region28: #{tpu_custom_call.1} parent=1 // pred_region
      _
    $region29: #{tpu_custom_call.1} parent=1 // pred_fallthru
      _
    // Predicated region
    $region30: #{tpu_custom_call.1} parent=1 // pred_check
      _
    $region31: #{tpu_custom_call.1} parent=1 // pred_check_branch
      %58 = sbr.rel (0) target = $region33
    $region32: #{tpu_custom_call.1} parent=1 // pred_region
      _
    $region33: #{tpu_custom_call.1} parent=1 // pred_fallthru
      _
    // Predicated region
    $region34: #{tpu_custom_call.1} parent=1 // pred_check
      _
    $region35: #{tpu_custom_call.1} parent=1 // pred_check_branch
      %60 = sbr.rel (0) target = $region37
    $region36: #{tpu_custom_call.1} parent=1 // pred_region
      %s62 = ssub.s32 2048, 2048
      %63 = vsyncadd [#allocation7], %s62
      %s64 = sshll.u32 [#allocation8], 4
      %s65 = int_to_ptr.vmem [resolvable:$true] %s64
      %70 = dma.hbm_to_vmem [thread:$0]  %s8, 2048, %s65, [#allocation7], 128, 128, 8
    $region37: #{tpu_custom_call.1} parent=1 // pred_fallthru
      _
    // Predicated region
    $region38: #{tpu_custom_call.1} parent=1 // pred_check
      _
    $region39: #{tpu_custom_call.1} parent=1 // pred_check_branch
      %72 = sbr.rel (0) target = $region41
    $region40: #{tpu_custom_call.1} parent=1 // pred_region
      _
    $region41: #{tpu_custom_call.1} parent=1 // pred_fallthru
      _
    // Predicated region
    $region42: #{tpu_custom_call.1} parent=1 // pred_check
      _
    $region43: #{tpu_custom_call.1} parent=1 // pred_check_branch
      %74 = sbr.rel (0) target = $region45
    $region44: #{tpu_custom_call.1} parent=1 // pred_region
      %s76 = ssub.s32 2048, 2048
      %77 = vsyncadd [#allocation10], %s76
      %s78 = sshll.u32 [#allocation9], 4
      %s79 = int_to_ptr.vmem [resolvable:$true] %s78
      %84 = dma.hbm_to_vmem [thread:$0]  %s10, 2048, %s79, [#allocation10], 128, 128, 8
    $region45: #{tpu_custom_call.1} parent=1 // pred_fallthru
      _
    // Predicated region
    $region46: #{tpu_custom_call.1} parent=1 // pred_check
      _
    $region47: #{tpu_custom_call.1} parent=1 // pred_check_branch
      %86 = sbr.rel (0) target = $region49
    $region48: #{tpu_custom_call.1} parent=1 // pred_region
      _
    $region49: #{tpu_custom_call.1} parent=1 // pred_fallthru
      _
    // Predicated region
    $region50: #{tpu_custom_call.1} parent=1 // pred_check
      _
    $region51: #{tpu_custom_call.1} parent=1 // pred_check_branch
      %88 = sbr.rel (0) target = $region53
    $region52: #{tpu_custom_call.1} parent=1 // pred_region
      %89 = dma.done [#allocation4], 512
    $region53: #{tpu_custom_call.1} parent=1 // pred_fallthru
      _
    // Predicated region
    $region54: #{tpu_custom_call.1} parent=1 // pred_check
      _
    $region55: #{tpu_custom_call.1} parent=1 // pred_check_branch
      %91 = sbr.rel (0) target = $region57
    $region56: #{tpu_custom_call.1} parent=1 // pred_region
      %92 = dma.done [#allocation7], 512
    $region57: #{tpu_custom_call.1} parent=1 // pred_fallthru
      _
    // Predicated region
    $region58: #{tpu_custom_call.1} parent=1 // pred_check
      _
    $region59: #{tpu_custom_call.1} parent=1 // pred_check_branch
      %94 = sbr.rel (0) target = $region61
    $region60: #{tpu_custom_call.1} parent=1 // pred_region
      %95 = dma.done [#allocation7], 2048
    $region61: #{tpu_custom_call.1} parent=1 // pred_fallthru
      _
    // Predicated region
    $region62: #{tpu_custom_call.1} parent=1 // pred_check
      _
    $region63: #{tpu_custom_call.1} parent=1 // pred_check_branch
      %97 = sbr.rel (0) target = $region65
    $region64: #{tpu_custom_call.1} parent=1 // pred_region
      %98 = dma.done [#allocation10], 2048
    $region65: #{tpu_custom_call.1} parent=1 // pred_fallthru
      _
    %v99 = vld [vmem:[#allocation3] sm:$0xf]
    %v100 = vld [vmem:[#allocation3 + $0x4] sm:$0xf]
    %v101 = vld [vmem:[#allocation3 + $0x8] sm:$0xf]
    %v102 = vld [vmem:[#allocation3 + $0xc] sm:$0xf]
    %v103 = vld [vmem:[#allocation3 + $0x10] sm:$0xf]
    %v104 = vld [vmem:[#allocation3 + $0x14] sm:$0xf]
    %v105 = vld [vmem:[#allocation3 + $0x18] sm:$0xf]
    %v106 = vld [vmem:[#allocation3 + $0x1c] sm:$0xf]
    %v107 = vunpack.c.l.bf16 %v99
    %v108 = vunpack.c.l.bf16 %v100
    %v109 = vunpack.c.l.bf16 %v101
    %v110 = vunpack.c.l.bf16 %v102
    %v111 = vunpack.c.l.bf16 %v103
    %v112 = vunpack.c.l.bf16 %v104
    %v113 = vunpack.c.l.bf16 %v105
    %v114 = vunpack.c.l.bf16 %v106
    %v115 = vld [vmem:[#allocation6] sm:$0xf]
    %v116 = vld [vmem:[#allocation6 + $0x4] sm:$0xf]
    %v117 = vld [vmem:[#allocation6 + $0x8] sm:$0xf]
    %v118 = vld [vmem:[#allocation6 + $0xc] sm:$0xf]
    %v119 = vld [vmem:[#allocation6 + $0x10] sm:$0xf]
    %v120 = vld [vmem:[#allocation6 + $0x14] sm:$0xf]
    %v121 = vld [vmem:[#allocation6 + $0x18] sm:$0xf]
    %v122 = vld [vmem:[#allocation6 + $0x1c] sm:$0xf]
    %v123 = vunpack.c.l.bf16 %v115
    %v124 = vunpack.c.l.bf16 %v116
    %v125 = vunpack.c.l.bf16 %v117
    %v126 = vunpack.c.l.bf16 %v118
    %v127 = vunpack.c.l.bf16 %v119
    %v128 = vunpack.c.l.bf16 %v120
    %v129 = vunpack.c.l.bf16 %v121
    %v130 = vunpack.c.l.bf16 %v122
    %v131 = vld [vmem:[%s2] sm:$0xff]
    %v132 = vld [vmem:[%s3] sm:$0xff]
    %v133 = vld [vmem:[%s4] sm:$0xff]
    %v134 = vrcp.pop %v133
    %v135 = vld [vmem:[%s5] sm:$0x1]
    %v136 = vld [vmem:[%s6] sm:$0x1]
    %v137 = vld [vmem:[#allocation2] sm:$0x1]
    %v138 = vld [vmem:[#allocation8] sm:$0xff]
    %v139 = vld [vmem:[#allocation8 + $0x8] sm:$0xff]
    %v140 = vld [vmem:[#allocation8 + $0x10] sm:$0xff]
    %v141 = vld [vmem:[#allocation8 + $0x18] sm:$0xff]
    %v142 = vld [vmem:[#allocation8 + $0x20] sm:$0xff]
    %v143 = vld [vmem:[#allocation8 + $0x28] sm:$0xff]
    %v144 = vld [vmem:[#allocation8 + $0x30] sm:$0xff]
    %v145 = vld [vmem:[#allocation8 + $0x38] sm:$0xff]
    %v146 = vld [vmem:[#allocation8 + $0x40] sm:$0xff]
    %v147 = vld [vmem:[#allocation8 + $0x48] sm:$0xff]
    %v148 = vld [vmem:[#allocation8 + $0x50] sm:$0xff]
    %v149 = vld [vmem:[#allocation8 + $0x58] sm:$0xff]
    %v150 = vld [vmem:[#allocation8 + $0x60] sm:$0xff]
    %v151 = vld [vmem:[#allocation8 + $0x68] sm:$0xff]
    %v152 = vld [vmem:[#allocation8 + $0x70] sm:$0xff]
    %v153 = vld [vmem:[#allocation8 + $0x78] sm:$0xff]
    %v154 = vld [vmem:[%s9] sm:$0x1]
    %v155 = vld [vmem:[#allocation9] sm:$0xff]
    %v156 = vld [vmem:[#allocation9 + $0x8] sm:$0xff]
    %v157 = vld [vmem:[#allocation9 + $0x10] sm:$0xff]
    %v158 = vld [vmem:[#allocation9 + $0x18] sm:$0xff]
    %v159 = vld [vmem:[#allocation9 + $0x20] sm:$0xff]
    %v160 = vld [vmem:[#allocation9 + $0x28] sm:$0xff]
    %v161 = vld [vmem:[#allocation9 + $0x30] sm:$0xff]
    %v162 = vld [vmem:[#allocation9 + $0x38] sm:$0xff]
    %v163 = vld [vmem:[#allocation9 + $0x40] sm:$0xff]
    %v164 = vld [vmem:[#allocation9 + $0x48] sm:$0xff]
    %v165 = vld [vmem:[#allocation9 + $0x50] sm:$0xff]
    %v166 = vld [vmem:[#allocation9 + $0x58] sm:$0xff]
    %v167 = vld [vmem:[#allocation9 + $0x60] sm:$0xff]
    %v168 = vld [vmem:[#allocation9 + $0x68] sm:$0xff]
    %v169 = vld [vmem:[#allocation9 + $0x70] sm:$0xff]
    %v170 = vld [vmem:[#allocation9 + $0x78] sm:$0xff]
    %v171 = vld [vmem:[%s11] sm:$0x1]
    %v172 = vlaneseq
    %v173 = vand.u32 %v172, 127
    %174 = vset.pattern.permute.xlu0 0
    %175 = vperm.xlu0 %174, %v132
    %v176 = vpop.permute.xlu0 %175
    %vm177 = vcmp.lt.s32.totalorder %v173, %v176
    %v178 = vsel %vm177, 1, 0
    %v179 = vcvt.s32.f32 %v178
    %v180 = vrot.slane %v123, 4
    %v181 = vadd.f32 %v123, %v180
    %v182 = vrot.slane %v181, 2
    %v183 = vadd.f32 %v181, %v182
    %v184 = vrot.slane %v183, 1
    %v185 = vadd.f32 %v183, %v184
    %v186 = vrot.slane %v124, 4
    %v187 = vadd.f32 %v124, %v186
    %v188 = vrot.slane %v187, 2
    %v189 = vadd.f32 %v187, %v188
    %v190 = vrot.slane %v189, 1
    %v191 = vadd.f32 %v189, %v190
    %v192 = vrot.slane %v125, 4
    %v193 = vadd.f32 %v125, %v192
    %v194 = vrot.slane %v193, 2
    %v195 = vadd.f32 %v193, %v194
    %v196 = vrot.slane %v195, 1
    %v197 = vadd.f32 %v195, %v196
    %v198 = vrot.slane %v126, 4
    %v199 = vadd.f32 %v126, %v198
    %v200 = vrot.slane %v199, 2
    %v201 = vadd.f32 %v199, %v200
    %v202 = vrot.slane %v201, 1
    %v203 = vadd.f32 %v201, %v202
    %v204 = vrot.slane %v127, 4
    %v205 = vadd.f32 %v127, %v204
    %v206 = vrot.slane %v205, 2
    %v207 = vadd.f32 %v205, %v206
    %v208 = vrot.slane %v207, 1
    %v209 = vadd.f32 %v207, %v208
    %v210 = vrot.slane %v128, 4
    %v211 = vadd.f32 %v128, %v210
    %v212 = vrot.slane %v211, 2
    %v213 = vadd.f32 %v211, %v212
    %v214 = vrot.slane %v213, 1
    %v215 = vadd.f32 %v213, %v214
    %v216 = vrot.slane %v129, 4
    %v217 = vadd.f32 %v129, %v216
    %v218 = vrot.slane %v217, 2
    %v219 = vadd.f32 %v217, %v218
    %v220 = vrot.slane %v219, 1
    %v221 = vadd.f32 %v219, %v220
    %v222 = vrot.slane %v130, 4
    %v223 = vadd.f32 %v130, %v222
    %v224 = vrot.slane %v223, 2
    %v225 = vadd.f32 %v223, %v224
    %v226 = vrot.slane %v225, 1
    %v227 = vadd.f32 %v225, %v226
    %229 = vset.pattern.permute.xlu0 0
    %230 = vperm.xlu0 %229, %v134
    %v231 = vpop.permute.xlu0 %230
    %v232 = vrot.slane %v231, 1
    %v233 = vrot.slane %v231, 2
    %v234 = vrot.slane %v231, 3
    %v235 = vrot.slane %v231, 4
    %v236 = vrot.slane %v231, 5
    %v237 = vrot.slane %v231, 6
    %v238 = vrot.slane %v231, 7
    %v247 = vmul.f32 %v185, %v231
    %v248 = vmul.f32 %v191, %v232
    %v249 = vmul.f32 %v197, %v233
    %v250 = vmul.f32 %v203, %v234
    %v251 = vmul.f32 %v209, %v235
    %v252 = vmul.f32 %v215, %v236
    %v253 = vmul.f32 %v221, %v237
    %v254 = vmul.f32 %v227, %v238
    %v256 = vlaneseq
    %v257 = vshrl.u32 %v256, 7
    %v258 = vsub.s32 0, %v257
    %v259 = vrot.slane %v135, %v258
    %v261 = vmul.f32 %v107, %v259
    %v262 = vmul.f32 %v108, %v259
    %v263 = vmul.f32 %v109, %v259
    %v264 = vmul.f32 %v110, %v259
    %v265 = vmul.f32 %v111, %v259
    %v266 = vmul.f32 %v112, %v259
    %v267 = vmul.f32 %v113, %v259
    %v268 = vmul.f32 %v114, %v259
    %269 = vadd.xlane.f32.xlu0 %v261
    %v270 = vpop.xlane.xlu0 %269
    %271 = vadd.xlane.f32.xlu0 %v262
    %v272 = vpop.xlane.xlu0 %271
    %273 = vadd.xlane.f32.xlu0 %v263
    %v274 = vpop.xlane.xlu0 %273
    %275 = vadd.xlane.f32.xlu0 %v264
    %v276 = vpop.xlane.xlu0 %275
    %277 = vadd.xlane.f32.xlu0 %v265
    %v278 = vpop.xlane.xlu0 %277
    %279 = vadd.xlane.f32.xlu0 %v266
    %v280 = vpop.xlane.xlu0 %279
    %281 = vadd.xlane.f32.xlu0 %v267
    %v282 = vpop.xlane.xlu0 %281
    %283 = vadd.xlane.f32.xlu0 %v268
    %v284 = vpop.xlane.xlu0 %283
    %v286 = vlaneseq
    %v287 = vshrl.u32 %v286, 7
    %v288 = vsub.s32 0, %v287
    %v289 = vrot.slane %v137, %v288
    %290 = vset.pattern.permute.xlu0 0
    %291 = vperm.xlu0 %290, %v289
    %v292 = vpop.permute.xlu0 %291
    %v294 = vadd.f32 %v270, %v292
    %v295 = vadd.f32 %v272, %v292
    %v296 = vadd.f32 %v274, %v292
    %v297 = vadd.f32 %v276, %v292
    %v298 = vadd.f32 %v278, %v292
    %v299 = vadd.f32 %v280, %v292
    %v300 = vadd.f32 %v282, %v292
    %v301 = vadd.f32 %v284, %v292
    %v303 = vlaneseq
    %v304 = vshrl.u32 %v303, 7
    %v305 = vsub.s32 0, %v304
    %v306 = vrot.slane %v136, %v305
    %v308 = vmul.f32 %v247, %v306
    %v309 = vmul.f32 %v248, %v306
    %v310 = vmul.f32 %v249, %v306
    %v311 = vmul.f32 %v250, %v306
    %v312 = vmul.f32 %v251, %v306
    %v313 = vmul.f32 %v252, %v306
    %v314 = vmul.f32 %v253, %v306
    %v315 = vmul.f32 %v254, %v306
    %v324 = vrot.slane %v309, 7
    %vm325 = vcmask 1041409
    %v326 = vsel %vm325, %v324, %v308
    %v327 = vrot.slane %v310, 6
    %vm328 = vcmask 1042434
    %v329 = vsel %vm328, %v327, %v326
    %v330 = vrot.slane %v311, 5
    %vm331 = vcmask 1043459
    %v332 = vsel %vm331, %v330, %v329
    %v333 = vrot.slane %v312, 4
    %vm334 = vcmask 1044484
    %v335 = vsel %vm334, %v333, %v332
    %v336 = vrot.slane %v313, 3
    %vm337 = vcmask 1045509
    %v338 = vsel %vm337, %v336, %v335
    %v339 = vrot.slane %v314, 2
    %vm340 = vcmask 1046534
    %v341 = vsel %vm340, %v339, %v338
    %v342 = vrot.slane %v315, 1
    %vm343 = vcmask 1047559
    %v344 = vsel %vm343, %v342, %v341
    %346 = vadd.xlane.f32.xlu0 %v344
    %v347 = vpop.xlane.xlu0 %346
    %v349 = vlaneseq
    %v350 = vshrl.u32 %v349, 7
    %v351 = vsub.s32 0, %v350
    %v352 = vrot.slane %v347, %v351
    %v353 = vlaneseq
    %v354 = vshrl.u32 %v353, 7
    %v355 = vsub.s32 1, %v354
    %v356 = vrot.slane %v347, %v355
    %v357 = vlaneseq
    %v358 = vshrl.u32 %v357, 7
    %v359 = vsub.s32 2, %v358
    %v360 = vrot.slane %v347, %v359
    %v361 = vlaneseq
    %v362 = vshrl.u32 %v361, 7
    %v363 = vsub.s32 3, %v362
    %v364 = vrot.slane %v347, %v363
    %v365 = vlaneseq
    %v366 = vshrl.u32 %v365, 7
    %v367 = vsub.s32 4, %v366
    %v368 = vrot.slane %v347, %v367
    %v369 = vlaneseq
    %v370 = vshrl.u32 %v369, 7
    %v371 = vsub.s32 5, %v370
    %v372 = vrot.slane %v347, %v371
    %v373 = vlaneseq
    %v374 = vshrl.u32 %v373, 7
    %v375 = vsub.s32 6, %v374
    %v376 = vrot.slane %v347, %v375
    %v377 = vlaneseq
    %v378 = vshrl.u32 %v377, 7
    %v379 = vsub.s32 7, %v378
    %v380 = vrot.slane %v347, %v379
    %v389 = vadd.f32 %v294, %v352
    %v390 = vadd.f32 %v295, %v356
    %v391 = vadd.f32 %v296, %v360
    %v392 = vadd.f32 %v297, %v364
    %v393 = vadd.f32 %v298, %v368
    %v394 = vadd.f32 %v299, %v372
    %v395 = vadd.f32 %v300, %v376
    %v396 = vadd.f32 %v301, %v380
    %v397 = vtanh.pop %v389
    %v398 = vtanh.pop %v390
    %v399 = vtanh.pop %v391
    %v400 = vtanh.pop %v392
    %v401 = vtanh.pop %v393
    %v402 = vtanh.pop %v394
    %v403 = vtanh.pop %v395
    %v404 = vtanh.pop %v396
    %v406 = vlaneseq
    %v407 = vshrl.u32 %v406, 7
    %v408 = vsub.s32 0, %v407
    %v409 = vrot.slane %v131, %v408
    %411 = vbcast.lane.b32.xlu0 %v409, 256
    %v412 = vpop.permute.xlu0 %411
    %v413 = vlaneseq
    %v414 = vshrl.u32 %v413, 7
    %v415 = vsub.s32 1, %v414
    %v416 = vrot.slane %v131, %v415
    %418 = vbcast.lane.b32.xlu0 %v416, 256
    %v419 = vpop.permute.xlu0 %418
    %v420 = vlaneseq
    %v421 = vshrl.u32 %v420, 7
    %v422 = vsub.s32 2, %v421
    %v423 = vrot.slane %v131, %v422
    %425 = vbcast.lane.b32.xlu0 %v423, 256
    %v426 = vpop.permute.xlu0 %425
    %v427 = vlaneseq
    %v428 = vshrl.u32 %v427, 7
    %v429 = vsub.s32 3, %v428
    %v430 = vrot.slane %v131, %v429
    %432 = vbcast.lane.b32.xlu0 %v430, 256
    %v433 = vpop.permute.xlu0 %432
    %v434 = vlaneseq
    %v435 = vshrl.u32 %v434, 7
    %v436 = vsub.s32 4, %v435
    %v437 = vrot.slane %v131, %v436
    %439 = vbcast.lane.b32.xlu0 %v437, 256
    %v440 = vpop.permute.xlu0 %439
    %v441 = vlaneseq
    %v442 = vshrl.u32 %v441, 7
    %v443 = vsub.s32 5, %v442
    %v444 = vrot.slane %v131, %v443
    %446 = vbcast.lane.b32.xlu0 %v444, 256
    %v447 = vpop.permute.xlu0 %446
    %v448 = vlaneseq
    %v449 = vshrl.u32 %v448, 7
    %v450 = vsub.s32 6, %v449
    %v451 = vrot.slane %v131, %v450
    %453 = vbcast.lane.b32.xlu0 %v451, 256
    %v454 = vpop.permute.xlu0 %453
    %v455 = vlaneseq
    %v456 = vshrl.u32 %v455, 7
    %v457 = vsub.s32 7, %v456
    %v458 = vrot.slane %v131, %v457
    %460 = vbcast.lane.b32.xlu0 %v458, 256
    %v461 = vpop.permute.xlu0 %460
    %v470 = vmul.f32 %v397, %v412
    %v471 = vmul.f32 %v398, %v419
    %v472 = vmul.f32 %v399, %v426
    %v473 = vmul.f32 %v400, %v433
    %v474 = vmul.f32 %v401, %v440
    %v475 = vmul.f32 %v402, %v447
    %v476 = vmul.f32 %v403, %v454
    %v477 = vmul.f32 %v404, %v461
    %v478 = vmul.f32 %v470, 1.442695
    %v479 = vpow.pop %v478
    %v480 = vmul.f32 %v471, 1.442695
    %v481 = vpow.pop %v480
    %v482 = vmul.f32 %v472, 1.442695
    %v483 = vpow.pop %v482
    %v484 = vmul.f32 %v473, 1.442695
    %v485 = vpow.pop %v484
    %v486 = vmul.f32 %v474, 1.442695
    %v487 = vpow.pop %v486
    %v488 = vmul.f32 %v475, 1.442695
    %v489 = vpow.pop %v488
    %v490 = vmul.f32 %v476, 1.442695
    %v491 = vpow.pop %v490
    %v492 = vmul.f32 %v477, 1.442695
    %v493 = vpow.pop %v492
    %v495 = vlaneseq
    %v496 = vshrl.u32 %v495, 7
    %v497 = vsub.s32 0, %v496
    %v498 = vrot.slane %v179, %v497
    %500 = vbcast.lane.b32.xlu0 %v498, 256
    %v501 = vpop.permute.xlu0 %500
    %v502 = vlaneseq
    %v503 = vshrl.u32 %v502, 7
    %v504 = vsub.s32 1, %v503
    %v505 = vrot.slane %v179, %v504
    %507 = vbcast.lane.b32.xlu0 %v505, 256
    %v508 = vpop.permute.xlu0 %507
    %v509 = vlaneseq
    %v510 = vshrl.u32 %v509, 7
    %v511 = vsub.s32 2, %v510
    %v512 = vrot.slane %v179, %v511
    %514 = vbcast.lane.b32.xlu0 %v512, 256
    %v515 = vpop.permute.xlu0 %514
    %v516 = vlaneseq
    %v517 = vshrl.u32 %v516, 7
    %v518 = vsub.s32 3, %v517
    %v519 = vrot.slane %v179, %v518
    %521 = vbcast.lane.b32.xlu0 %v519, 256
    %v522 = vpop.permute.xlu0 %521
    %v523 = vlaneseq
    %v524 = vshrl.u32 %v523, 7
    %v525 = vsub.s32 4, %v524
    %v526 = vrot.slane %v179, %v525
    %528 = vbcast.lane.b32.xlu0 %v526, 256
    %v529 = vpop.permute.xlu0 %528
    %v530 = vlaneseq
    %v531 = vshrl.u32 %v530, 7
    %v532 = vsub.s32 5, %v531
    %v533 = vrot.slane %v179, %v532
    %535 = vbcast.lane.b32.xlu0 %v533, 256
    %v536 = vpop.permute.xlu0 %535
    %v537 = vlaneseq
    %v538 = vshrl.u32 %v537, 7
    %v539 = vsub.s32 6, %v538
    %v540 = vrot.slane %v179, %v539
    %542 = vbcast.lane.b32.xlu0 %v540, 256
    %v543 = vpop.permute.xlu0 %542
    %v544 = vlaneseq
    %v545 = vshrl.u32 %v544, 7
    %v546 = vsub.s32 7, %v545
    %v547 = vrot.slane %v179, %v546
    %549 = vbcast.lane.b32.xlu0 %v547, 256
    %v550 = vpop.permute.xlu0 %549
    %v559 = vmul.f32 %v479, %v501
    %v560 = vmul.f32 %v481, %v508
    %v561 = vmul.f32 %v483, %v515
    %v562 = vmul.f32 %v485, %v522
    %v563 = vmul.f32 %v487, %v529
    %v564 = vmul.f32 %v489, %v536
    %v565 = vmul.f32 %v491, %v543
    %v566 = vmul.f32 %v493, %v550
    %575 = vset.pattern.permute.xlu0 0
    %576 = vperm.xlu0 %575, %v559
    %v577 = vpop.permute.xlu0 %576
    %578 = vset.pattern.permute.xlu0 0
    %579 = vperm.xlu0 %578, %v560
    %v580 = vpop.permute.xlu0 %579
    %581 = vset.pattern.permute.xlu0 0
    %582 = vperm.xlu0 %581, %v561
    %v583 = vpop.permute.xlu0 %582
    %584 = vset.pattern.permute.xlu0 0
    %585 = vperm.xlu0 %584, %v562
    %v586 = vpop.permute.xlu0 %585
    %587 = vset.pattern.permute.xlu0 0
    %588 = vperm.xlu0 %587, %v563
    %v589 = vpop.permute.xlu0 %588
    %590 = vset.pattern.permute.xlu0 0
    %591 = vperm.xlu0 %590, %v564
    %v592 = vpop.permute.xlu0 %591
    %593 = vset.pattern.permute.xlu0 0
    %594 = vperm.xlu0 %593, %v565
    %v595 = vpop.permute.xlu0 %594
    %596 = vset.pattern.permute.xlu0 0
    %597 = vperm.xlu0 %596, %v566
    %v598 = vpop.permute.xlu0 %597
    %v599 = vlaneseq
    %v600 = vshrl.u32 %v599, 7
    %v601 = vsub.s32 %v173, %v600
    %v602 = vrot.slane %v577, %v601
    %v603 = vlaneseq
    %v604 = vshrl.u32 %v603, 7
    %v605 = vsub.s32 %v173, %v604
    %v606 = vrot.slane %v580, %v605
    %v607 = vlaneseq
    %v608 = vshrl.u32 %v607, 7
    %v609 = vsub.s32 %v173, %v608
    %v610 = vrot.slane %v583, %v609
    %v611 = vlaneseq
    %v612 = vshrl.u32 %v611, 7
    %v613 = vsub.s32 %v173, %v612
    %v614 = vrot.slane %v586, %v613
    %v615 = vlaneseq
    %v616 = vshrl.u32 %v615, 7
    %v617 = vsub.s32 %v173, %v616
    %v618 = vrot.slane %v589, %v617
    %v619 = vlaneseq
    %v620 = vshrl.u32 %v619, 7
    %v621 = vsub.s32 %v173, %v620
    %v622 = vrot.slane %v592, %v621
    %v623 = vlaneseq
    %v624 = vshrl.u32 %v623, 7
    %v625 = vsub.s32 %v173, %v624
    %v626 = vrot.slane %v595, %v625
    %v627 = vlaneseq
    %v628 = vshrl.u32 %v627, 7
    %v629 = vsub.s32 %v173, %v628
    %v630 = vrot.slane %v598, %v629
    %v631 = vsel %vm325, %v606, %v602
    %v632 = vsel %vm328, %v610, %v631
    %v633 = vsel %vm331, %v614, %v632
    %v634 = vsel %vm334, %v618, %v633
    %v635 = vsel %vm337, %v622, %v634
    %v636 = vsel %vm340, %v626, %v635
    %v637 = vsel %vm343, %v630, %v636
    %vm639 = vcmask 64512
    %v640 = vsel %vm639, %v637, 0.0
    %641 = vadd.xlane.f32.xlu0 %v640
    %v642 = vpop.xlane.xlu0 %641
    %v643 = vmax.f32 %v642, 1e-20
    %v644 = vrcp.pop %v643
    %v646 = vlaneseq
    %v647 = vshrl.u32 %v646, 7
    %v648 = vsub.s32 0, %v647
    %v649 = vrot.slane %v644, %v648
    %v650 = vlaneseq
    %v651 = vshrl.u32 %v650, 7
    %v652 = vsub.s32 1, %v651
    %v653 = vrot.slane %v644, %v652
    %v654 = vlaneseq
    %v655 = vshrl.u32 %v654, 7
    %v656 = vsub.s32 2, %v655
    %v657 = vrot.slane %v644, %v656
    %v658 = vlaneseq
    %v659 = vshrl.u32 %v658, 7
    %v660 = vsub.s32 3, %v659
    %v661 = vrot.slane %v644, %v660
    %v662 = vlaneseq
    %v663 = vshrl.u32 %v662, 7
    %v664 = vsub.s32 4, %v663
    %v665 = vrot.slane %v644, %v664
    %v666 = vlaneseq
    %v667 = vshrl.u32 %v666, 7
    %v668 = vsub.s32 5, %v667
    %v669 = vrot.slane %v644, %v668
    %v670 = vlaneseq
    %v671 = vshrl.u32 %v670, 7
    %v672 = vsub.s32 6, %v671
    %v673 = vrot.slane %v644, %v672
    %v674 = vlaneseq
    %v675 = vshrl.u32 %v674, 7
    %v676 = vsub.s32 7, %v675
    %v677 = vrot.slane %v644, %v676
    %v686 = vmul.f32 %v559, %v649
    %v687 = vmul.f32 %v560, %v653
    %v688 = vmul.f32 %v561, %v657
    %v689 = vmul.f32 %v562, %v661
    %v690 = vmul.f32 %v563, %v665
    %v691 = vmul.f32 %v564, %v669
    %v692 = vmul.f32 %v565, %v673
    %v693 = vmul.f32 %v566, %v677
    %695 = vset.pattern.permute.xlu0 0
    %696 = vperm.xlu0 %695, %v686
    %v697 = vpop.permute.xlu0 %696
    %700 = vset.pattern.permute.xlu0 0
    %701 = vperm.xlu0 %700, %v687
    %v702 = vpop.permute.xlu0 %701
    %705 = vset.pattern.permute.xlu0 0
    %706 = vperm.xlu0 %705, %v688
    %v707 = vpop.permute.xlu0 %706
    %710 = vset.pattern.permute.xlu0 0
    %711 = vperm.xlu0 %710, %v689
    %v712 = vpop.permute.xlu0 %711
    %715 = vset.pattern.permute.xlu0 0
    %716 = vperm.xlu0 %715, %v690
    %v717 = vpop.permute.xlu0 %716
    %720 = vset.pattern.permute.xlu0 0
    %721 = vperm.xlu0 %720, %v691
    %v722 = vpop.permute.xlu0 %721
    %725 = vset.pattern.permute.xlu0 0
    %726 = vperm.xlu0 %725, %v692
    %v727 = vpop.permute.xlu0 %726
    %730 = vset.pattern.permute.xlu0 0
    %731 = vperm.xlu0 %730, %v693
    %v732 = vpop.permute.xlu0 %731
    %v734 = vmul.f32 %v697, %v107
    %v735 = vmul.f32 %v702, %v108
    %v736 = vmul.f32 %v707, %v109
    %v737 = vmul.f32 %v712, %v110
    %v738 = vmul.f32 %v717, %v111
    %v739 = vmul.f32 %v722, %v112
    %v740 = vmul.f32 %v727, %v113
    %v741 = vmul.f32 %v732, %v114
    %v742 = vrot.slane %v734, 4
    %v743 = vadd.f32 %v734, %v742
    %v744 = vrot.slane %v743, 2
    %v745 = vadd.f32 %v743, %v744
    %v746 = vrot.slane %v745, 1
    %v747 = vadd.f32 %v745, %v746
    %v748 = vrot.slane %v735, 4
    %v749 = vadd.f32 %v735, %v748
    %v750 = vrot.slane %v749, 2
    %v751 = vadd.f32 %v749, %v750
    %v752 = vrot.slane %v751, 1
    %v753 = vadd.f32 %v751, %v752
    %v754 = vrot.slane %v736, 4
    %v755 = vadd.f32 %v736, %v754
    %v756 = vrot.slane %v755, 2
    %v757 = vadd.f32 %v755, %v756
    %v758 = vrot.slane %v757, 1
    %v759 = vadd.f32 %v757, %v758
    %v760 = vrot.slane %v737, 4
    %v761 = vadd.f32 %v737, %v760
    %v762 = vrot.slane %v761, 2
    %v763 = vadd.f32 %v761, %v762
    %v764 = vrot.slane %v763, 1
    %v765 = vadd.f32 %v763, %v764
    %v766 = vrot.slane %v738, 4
    %v767 = vadd.f32 %v738, %v766
    %v768 = vrot.slane %v767, 2
    %v769 = vadd.f32 %v767, %v768
    %v770 = vrot.slane %v769, 1
    %v771 = vadd.f32 %v769, %v770
    %v772 = vrot.slane %v739, 4
    %v773 = vadd.f32 %v739, %v772
    %v774 = vrot.slane %v773, 2
    %v775 = vadd.f32 %v773, %v774
    %v776 = vrot.slane %v775, 1
    %v777 = vadd.f32 %v775, %v776
    %v778 = vrot.slane %v740, 4
    %v779 = vadd.f32 %v740, %v778
    %v780 = vrot.slane %v779, 2
    %v781 = vadd.f32 %v779, %v780
    %v782 = vrot.slane %v781, 1
    %v783 = vadd.f32 %v781, %v782
    %v784 = vrot.slane %v741, 4
    %v785 = vadd.f32 %v741, %v784
    %v786 = vrot.slane %v785, 2
    %v787 = vadd.f32 %v785, %v786
    %v788 = vrot.slane %v787, 1
    %v789 = vadd.f32 %v787, %v788
    %v791 = vlaneseq
    %v792 = vshrl.u32 %v791, 7
    %v793 = vsub.s32 0, %v792
    %v794 = vrot.slane %v154, %v793
    %v804 = vrot.slane %v248, 7
    %v805 = vsel %vm325, %v804, %v247
    %v806 = vrot.slane %v249, 6
    %v807 = vsel %vm328, %v806, %v805
    %v808 = vrot.slane %v250, 5
    %v809 = vsel %vm331, %v808, %v807
    %v810 = vrot.slane %v251, 4
    %v811 = vsel %vm334, %v810, %v809
    %v812 = vrot.slane %v252, 3
    %v813 = vsel %vm337, %v812, %v811
    %v814 = vrot.slane %v253, 2
    %v815 = vsel %vm340, %v814, %v813
    %v816 = vrot.slane %v254, 1
    %v817 = vsel %vm343, %v816, %v815
    %819 = vmatprep.subr.mxu0 0.0
    %820 = vmatpush1.msra.mxu0 %v153
    %821 = vmatprep.subr.mxu0 0.0
    %822 = vmatpush1.msra.mxu0 %v152
    %823 = vmatprep.subr.mxu0 0.0
    %824 = vmatpush1.msra.mxu0 %v151
    %825 = vmatprep.subr.mxu0 0.0
    %826 = vmatpush1.msra.mxu0 %v150
    %827 = vmatprep.subr.mxu0 0.0
    %828 = vmatpush1.msra.mxu0 %v149
    %829 = vmatprep.subr.mxu0 0.0
    %830 = vmatpush1.msra.mxu0 %v148
    %831 = vmatprep.subr.mxu0 0.0
    %832 = vmatpush1.msra.mxu0 %v147
    %833 = vmatprep.subr.mxu0 0.0
    %834 = vmatpush1.msra.mxu0 %v146
    %835 = vmatprep.subr.mxu0 0.0
    %836 = vmatpush1.msra.mxu0 %v145
    %837 = vmatprep.subr.mxu0 0.0
    %838 = vmatpush1.msra.mxu0 %v144
    %839 = vmatprep.subr.mxu0 0.0
    %840 = vmatpush1.msra.mxu0 %v143
    %841 = vmatprep.subr.mxu0 0.0
    %842 = vmatpush1.msra.mxu0 %v142
    %843 = vmatprep.subr.mxu0 0.0
    %844 = vmatpush1.msra.mxu0 %v141
    %845 = vmatprep.subr.mxu0 0.0
    %846 = vmatpush1.msra.mxu0 %v140
    %847 = vmatprep.subr.mxu0 0.0
    %848 = vmatpush1.msra.mxu0 %v139
    %849 = vmatprep.subr.mxu0 0.0
    %850 = vmatpush1.msra.mxu0 %v138
    %851 = vmatprep.subr.mxu0 0.0
    %852 = vmatpush2.msra.mxu0 0.0
    %853 = vmatprep.subr.mxu0 0.0
    %854 = vmatpush2.msra.mxu0 0.0
    %855 = vmatprep.subr.mxu0 0.0
    %856 = vmatpush2.msra.mxu0 0.0
    %857 = vmatprep.subr.mxu0 0.0
    %858 = vmatpush2.msra.mxu0 0.0
    %859 = vmatprep.subr.mxu0 0.0
    %860 = vmatpush2.msra.mxu0 0.0
    %861 = vmatprep.subr.mxu0 0.0
    %862 = vmatpush2.msra.mxu0 0.0
    %863 = vmatprep.subr.mxu0 0.0
    %864 = vmatpush2.msra.mxu0 0.0
    %865 = vmatprep.subr.mxu0 0.0
    %866 = vmatpush2.msra.mxu0 0.0
    %867 = vmatprep.subr.mxu0 0.0
    %868 = vmatpush2.msra.mxu0 0.0
    %869 = vmatprep.subr.mxu0 0.0
    %870 = vmatpush2.msra.mxu0 0.0
    %871 = vmatprep.subr.mxu0 0.0
    %872 = vmatpush2.msra.mxu0 0.0
    %873 = vmatprep.subr.mxu0 0.0
    %874 = vmatpush2.msra.mxu0 0.0
    %875 = vmatprep.subr.mxu0 0.0
    %876 = vmatpush2.msra.mxu0 0.0
    %877 = vmatprep.subr.mxu0 0.0
    %878 = vmatpush2.msra.mxu0 0.0
    %879 = vmatprep.subr.mxu0 0.0
    %880 = vmatpush2.msra.mxu0 0.0
    %881 = vmatprep.subr.mxu0 0.0
    %882 = vmatpush2.msra.mxu0 0.0
    %883 = vmatprep.mubr.f32.mxu0 0.0
    %884 = vmatmul.mubr.f32.gmra.mxu0 %v817
    %v885 = vpop.f32.mrf.mxu0
    %v886 = vadd.f32 %v794, %v885
    %v887 = vpop.f32.mrf.mxu0
    %888 = vdwg.mxu0
    %v897 = vsel %vm325, %v753, %v747
    %v898 = vsel %vm328, %v759, %v897
    %v899 = vsel %vm331, %v765, %v898
    %v900 = vsel %vm334, %v771, %v899
    %v901 = vsel %vm337, %v777, %v900
    %v902 = vsel %vm340, %v783, %v901
    %v903 = vsel %vm343, %v789, %v902
    %v905 = vadd.f32 %v886, %v903
    %v906 = vmul.f32 %v905, %v306
    %907 = vadd.xlane.f32.xlu0 %v906
    %v908 = vpop.xlane.xlu0 %907
    %v910 = vlaneseq
    %v911 = vshrl.u32 %v910, 7
    %v912 = vsub.s32 0, %v911
    %v913 = vrot.slane %v908, %v912
    %v914 = vlaneseq
    %v915 = vshrl.u32 %v914, 7
    %v916 = vsub.s32 1, %v915
    %v917 = vrot.slane %v908, %v916
    %v918 = vlaneseq
    %v919 = vshrl.u32 %v918, 7
    %v920 = vsub.s32 2, %v919
    %v921 = vrot.slane %v908, %v920
    %v922 = vlaneseq
    %v923 = vshrl.u32 %v922, 7
    %v924 = vsub.s32 3, %v923
    %v925 = vrot.slane %v908, %v924
    %v926 = vlaneseq
    %v927 = vshrl.u32 %v926, 7
    %v928 = vsub.s32 4, %v927
    %v929 = vrot.slane %v908, %v928
    %v930 = vlaneseq
    %v931 = vshrl.u32 %v930, 7
    %v932 = vsub.s32 5, %v931
    %v933 = vrot.slane %v908, %v932
    %v934 = vlaneseq
    %v935 = vshrl.u32 %v934, 7
    %v936 = vsub.s32 6, %v935
    %v937 = vrot.slane %v908, %v936
    %v938 = vlaneseq
    %v939 = vshrl.u32 %v938, 7
    %v940 = vsub.s32 7, %v939
    %v941 = vrot.slane %v908, %v940
    %v950 = vadd.f32 %v294, %v913
    %v951 = vadd.f32 %v295, %v917
    %v952 = vadd.f32 %v296, %v921
    %v953 = vadd.f32 %v297, %v925
    %v954 = vadd.f32 %v298, %v929
    %v955 = vadd.f32 %v299, %v933
    %v956 = vadd.f32 %v300, %v937
    %v957 = vadd.f32 %v301, %v941
    %v958 = vtanh.pop %v950
    %v959 = vtanh.pop %v951
    %v960 = vtanh.pop %v952
    %v961 = vtanh.pop %v953
    %v962 = vtanh.pop %v954
    %v963 = vtanh.pop %v955
    %v964 = vtanh.pop %v956
    %v965 = vtanh.pop %v957
    %v966 = vmul.f32 %v958, %v412
    %v967 = vmul.f32 %v959, %v419
    %v968 = vmul.f32 %v960, %v426
    %v969 = vmul.f32 %v961, %v433
    %v970 = vmul.f32 %v962, %v440
    %v971 = vmul.f32 %v963, %v447
    %v972 = vmul.f32 %v964, %v454
    %v973 = vmul.f32 %v965, %v461
    %v974 = vmul.f32 %v966, 1.442695
    %v975 = vpow.pop %v974
    %v976 = vmul.f32 %v967, 1.442695
    %v977 = vpow.pop %v976
    %v978 = vmul.f32 %v968, 1.442695
    %v979 = vpow.pop %v978
    %v980 = vmul.f32 %v969, 1.442695
    %v981 = vpow.pop %v980
    %v982 = vmul.f32 %v970, 1.442695
    %v983 = vpow.pop %v982
    %v984 = vmul.f32 %v971, 1.442695
    %v985 = vpow.pop %v984
    %v986 = vmul.f32 %v972, 1.442695
    %v987 = vpow.pop %v986
    %v988 = vmul.f32 %v973, 1.442695
    %v989 = vpow.pop %v988
    %v990 = vmul.f32 %v975, %v501
    %v991 = vmul.f32 %v977, %v508
    %v992 = vmul.f32 %v979, %v515
    %v993 = vmul.f32 %v981, %v522
    %v994 = vmul.f32 %v983, %v529
    %v995 = vmul.f32 %v985, %v536
    %v996 = vmul.f32 %v987, %v543
    %v997 = vmul.f32 %v989, %v550
    %1006 = vset.pattern.permute.xlu0 0
    %1007 = vperm.xlu0 %1006, %v990
    %v1008 = vpop.permute.xlu0 %1007
    %1009 = vset.pattern.permute.xlu0 0
    %1010 = vperm.xlu0 %1009, %v991
    %v1011 = vpop.permute.xlu0 %1010
    %1012 = vset.pattern.permute.xlu0 0
    %1013 = vperm.xlu0 %1012, %v992
    %v1014 = vpop.permute.xlu0 %1013
    %1015 = vset.pattern.permute.xlu0 0
    %1016 = vperm.xlu0 %1015, %v993
    %v1017 = vpop.permute.xlu0 %1016
    %1018 = vset.pattern.permute.xlu0 0
    %1019 = vperm.xlu0 %1018, %v994
    %v1020 = vpop.permute.xlu0 %1019
    %1021 = vset.pattern.permute.xlu0 0
    %1022 = vperm.xlu0 %1021, %v995
    %v1023 = vpop.permute.xlu0 %1022
    %1024 = vset.pattern.permute.xlu0 0
    %1025 = vperm.xlu0 %1024, %v996
    %v1026 = vpop.permute.xlu0 %1025
    %1027 = vset.pattern.permute.xlu0 0
    %1028 = vperm.xlu0 %1027, %v997
    %v1029 = vpop.permute.xlu0 %1028
    %v1030 = vlaneseq
    %v1031 = vshrl.u32 %v1030, 7
    %v1032 = vsub.s32 %v173, %v1031
    %v1033 = vrot.slane %v1008, %v1032
    %v1034 = vlaneseq
    %v1035 = vshrl.u32 %v1034, 7
    %v1036 = vsub.s32 %v173, %v1035
    %v1037 = vrot.slane %v1011, %v1036
    %v1038 = vlaneseq
    %v1039 = vshrl.u32 %v1038, 7
    %v1040 = vsub.s32 %v173, %v1039
    %v1041 = vrot.slane %v1014, %v1040
    %v1042 = vlaneseq
    %v1043 = vshrl.u32 %v1042, 7
    %v1044 = vsub.s32 %v173, %v1043
    %v1045 = vrot.slane %v1017, %v1044
    %v1046 = vlaneseq
    %v1047 = vshrl.u32 %v1046, 7
    %v1048 = vsub.s32 %v173, %v1047
    %v1049 = vrot.slane %v1020, %v1048
    %v1050 = vlaneseq
    %v1051 = vshrl.u32 %v1050, 7
    %v1052 = vsub.s32 %v173, %v1051
    %v1053 = vrot.slane %v1023, %v1052
    %v1054 = vlaneseq
    %v1055 = vshrl.u32 %v1054, 7
    %v1056 = vsub.s32 %v173, %v1055
    %v1057 = vrot.slane %v1026, %v1056
    %v1058 = vlaneseq
    %v1059 = vshrl.u32 %v1058, 7
    %v1060 = vsub.s32 %v173, %v1059
    %v1061 = vrot.slane %v1029, %v1060
    %v1062 = vsel %vm325, %v1037, %v1033
    %v1063 = vsel %vm328, %v1041, %v1062
    %v1064 = vsel %vm331, %v1045, %v1063
    %v1065 = vsel %vm334, %v1049, %v1064
    %v1066 = vsel %vm337, %v1053, %v1065
    %v1067 = vsel %vm340, %v1057, %v1066
    %v1068 = vsel %vm343, %v1061, %v1067
    %v1070 = vsel %vm639, %v1068, 0.0
    %1071 = vadd.xlane.f32.xlu0 %v1070
    %v1072 = vpop.xlane.xlu0 %1071
    %v1073 = vmax.f32 %v1072, 1e-20
    %v1074 = vrcp.pop %v1073
    %v1076 = vlaneseq
    %v1077 = vshrl.u32 %v1076, 7
    %v1078 = vsub.s32 0, %v1077
    %v1079 = vrot.slane %v1074, %v1078
    %v1080 = vlaneseq
    %v1081 = vshrl.u32 %v1080, 7
    %v1082 = vsub.s32 1, %v1081
    %v1083 = vrot.slane %v1074, %v1082
    %v1084 = vlaneseq
    %v1085 = vshrl.u32 %v1084, 7
    %v1086 = vsub.s32 2, %v1085
    %v1087 = vrot.slane %v1074, %v1086
    %v1088 = vlaneseq
    %v1089 = vshrl.u32 %v1088, 7
    %v1090 = vsub.s32 3, %v1089
    %v1091 = vrot.slane %v1074, %v1090
    %v1092 = vlaneseq
    %v1093 = vshrl.u32 %v1092, 7
    %v1094 = vsub.s32 4, %v1093
    %v1095 = vrot.slane %v1074, %v1094
    %v1096 = vlaneseq
    %v1097 = vshrl.u32 %v1096, 7
    %v1098 = vsub.s32 5, %v1097
    %v1099 = vrot.slane %v1074, %v1098
    %v1100 = vlaneseq
    %v1101 = vshrl.u32 %v1100, 7
    %v1102 = vsub.s32 6, %v1101
    %v1103 = vrot.slane %v1074, %v1102
    %v1104 = vlaneseq
    %v1105 = vshrl.u32 %v1104, 7
    %v1106 = vsub.s32 7, %v1105
    %v1107 = vrot.slane %v1074, %v1106
    %v1116 = vmul.f32 %v990, %v1079
    %v1117 = vmul.f32 %v991, %v1083
    %v1118 = vmul.f32 %v992, %v1087
    %v1119 = vmul.f32 %v993, %v1091
    %v1120 = vmul.f32 %v994, %v1095
    %v1121 = vmul.f32 %v995, %v1099
    %v1122 = vmul.f32 %v996, %v1103
    %v1123 = vmul.f32 %v997, %v1107
    %1125 = vset.pattern.permute.xlu0 0
    %1126 = vperm.xlu0 %1125, %v1116
    %v1127 = vpop.permute.xlu0 %1126
    %1130 = vset.pattern.permute.xlu0 0
    %1131 = vperm.xlu0 %1130, %v1117
    %v1132 = vpop.permute.xlu0 %1131
    %1135 = vset.pattern.permute.xlu0 0
    %1136 = vperm.xlu0 %1135, %v1118
    %v1137 = vpop.permute.xlu0 %1136
    %1140 = vset.pattern.permute.xlu0 0
    %1141 = vperm.xlu0 %1140, %v1119
    %v1142 = vpop.permute.xlu0 %1141
    %1145 = vset.pattern.permute.xlu0 0
    %1146 = vperm.xlu0 %1145, %v1120
    %v1147 = vpop.permute.xlu0 %1146
    %1150 = vset.pattern.permute.xlu0 0
    %1151 = vperm.xlu0 %1150, %v1121
    %v1152 = vpop.permute.xlu0 %1151
    %1155 = vset.pattern.permute.xlu0 0
    %1156 = vperm.xlu0 %1155, %v1122
    %v1157 = vpop.permute.xlu0 %1156
    %1160 = vset.pattern.permute.xlu0 0
    %1161 = vperm.xlu0 %1160, %v1123
    %v1162 = vpop.permute.xlu0 %1161
    %v1164 = vmul.f32 %v1127, %v107
    %v1165 = vmul.f32 %v1132, %v108
    %v1166 = vmul.f32 %v1137, %v109
    %v1167 = vmul.f32 %v1142, %v110
    %v1168 = vmul.f32 %v1147, %v111
    %v1169 = vmul.f32 %v1152, %v112
    %v1170 = vmul.f32 %v1157, %v113
    %v1171 = vmul.f32 %v1162, %v114
    %v1172 = vrot.slane %v1164, 4
    %v1173 = vadd.f32 %v1164, %v1172
    %v1174 = vrot.slane %v1173, 2
    %v1175 = vadd.f32 %v1173, %v1174
    %v1176 = vrot.slane %v1175, 1
    %v1177 = vadd.f32 %v1175, %v1176
    %v1178 = vrot.slane %v1165, 4
    %v1179 = vadd.f32 %v1165, %v1178
    %v1180 = vrot.slane %v1179, 2
    %v1181 = vadd.f32 %v1179, %v1180
    %v1182 = vrot.slane %v1181, 1
    %v1183 = vadd.f32 %v1181, %v1182
    %v1184 = vrot.slane %v1166, 4
    %v1185 = vadd.f32 %v1166, %v1184
    %v1186 = vrot.slane %v1185, 2
    %v1187 = vadd.f32 %v1185, %v1186
    %v1188 = vrot.slane %v1187, 1
    %v1189 = vadd.f32 %v1187, %v1188
    %v1190 = vrot.slane %v1167, 4
    %v1191 = vadd.f32 %v1167, %v1190
    %v1192 = vrot.slane %v1191, 2
    %v1193 = vadd.f32 %v1191, %v1192
    %v1194 = vrot.slane %v1193, 1
    %v1195 = vadd.f32 %v1193, %v1194
    %v1196 = vrot.slane %v1168, 4
    %v1197 = vadd.f32 %v1168, %v1196
    %v1198 = vrot.slane %v1197, 2
    %v1199 = vadd.f32 %v1197, %v1198
    %v1200 = vrot.slane %v1199, 1
    %v1201 = vadd.f32 %v1199, %v1200
    %v1202 = vrot.slane %v1169, 4
    %v1203 = vadd.f32 %v1169, %v1202
    %v1204 = vrot.slane %v1203, 2
    %v1205 = vadd.f32 %v1203, %v1204
    %v1206 = vrot.slane %v1205, 1
    %v1207 = vadd.f32 %v1205, %v1206
    %v1208 = vrot.slane %v1170, 4
    %v1209 = vadd.f32 %v1170, %v1208
    %v1210 = vrot.slane %v1209, 2
    %v1211 = vadd.f32 %v1209, %v1210
    %v1212 = vrot.slane %v1211, 1
    %v1213 = vadd.f32 %v1211, %v1212
    %v1214 = vrot.slane %v1171, 4
    %v1215 = vadd.f32 %v1171, %v1214
    %v1216 = vrot.slane %v1215, 2
    %v1217 = vadd.f32 %v1215, %v1216
    %v1218 = vrot.slane %v1217, 1
    %v1219 = vadd.f32 %v1217, %v1218
    %1220 = vmatprep.subr.mxu0 0.0
    %1221 = vmatpush1.msra.mxu0 %v153
    %1222 = vmatprep.subr.mxu0 0.0
    %1223 = vmatpush1.msra.mxu0 %v152
    %1224 = vmatprep.subr.mxu0 0.0
    %1225 = vmatpush1.msra.mxu0 %v151
    %1226 = vmatprep.subr.mxu0 0.0
    %1227 = vmatpush1.msra.mxu0 %v150
    %1228 = vmatprep.subr.mxu0 0.0
    %1229 = vmatpush1.msra.mxu0 %v149
    %1230 = vmatprep.subr.mxu0 0.0
    %1231 = vmatpush1.msra.mxu0 %v148
    %1232 = vmatprep.subr.mxu0 0.0
    %1233 = vmatpush1.msra.mxu0 %v147
    %1234 = vmatprep.subr.mxu0 0.0
    %1235 = vmatpush1.msra.mxu0 %v146
    %1236 = vmatprep.subr.mxu0 0.0
    %1237 = vmatpush1.msra.mxu0 %v145
    %1238 = vmatprep.subr.mxu0 0.0
    %1239 = vmatpush1.msra.mxu0 %v144
    %1240 = vmatprep.subr.mxu0 0.0
    %1241 = vmatpush1.msra.mxu0 %v143
    %1242 = vmatprep.subr.mxu0 0.0
    %1243 = vmatpush1.msra.mxu0 %v142
    %1244 = vmatprep.subr.mxu0 0.0
    %1245 = vmatpush1.msra.mxu0 %v141
    %1246 = vmatprep.subr.mxu0 0.0
    %1247 = vmatpush1.msra.mxu0 %v140
    %1248 = vmatprep.subr.mxu0 0.0
    %1249 = vmatpush1.msra.mxu0 %v139
    %1250 = vmatprep.subr.mxu0 0.0
    %1251 = vmatpush1.msra.mxu0 %v138
    %1252 = vmatprep.subr.mxu0 0.0
    %1253 = vmatpush2.msra.mxu0 0.0
    %1254 = vmatprep.subr.mxu0 0.0
    %1255 = vmatpush2.msra.mxu0 0.0
    %1256 = vmatprep.subr.mxu0 0.0
    %1257 = vmatpush2.msra.mxu0 0.0
    %1258 = vmatprep.subr.mxu0 0.0
    %1259 = vmatpush2.msra.mxu0 0.0
    %1260 = vmatprep.subr.mxu0 0.0
    %1261 = vmatpush2.msra.mxu0 0.0
    %1262 = vmatprep.subr.mxu0 0.0
    %1263 = vmatpush2.msra.mxu0 0.0
    %1264 = vmatprep.subr.mxu0 0.0
    %1265 = vmatpush2.msra.mxu0 0.0
    %1266 = vmatprep.subr.mxu0 0.0
    %1267 = vmatpush2.msra.mxu0 0.0
    %1268 = vmatprep.subr.mxu0 0.0
    %1269 = vmatpush2.msra.mxu0 0.0
    %1270 = vmatprep.subr.mxu0 0.0
    %1271 = vmatpush2.msra.mxu0 0.0
    %1272 = vmatprep.subr.mxu0 0.0
    %1273 = vmatpush2.msra.mxu0 0.0
    %1274 = vmatprep.subr.mxu0 0.0
    %1275 = vmatpush2.msra.mxu0 0.0
    %1276 = vmatprep.subr.mxu0 0.0
    %1277 = vmatpush2.msra.mxu0 0.0
    %1278 = vmatprep.subr.mxu0 0.0
    %1279 = vmatpush2.msra.mxu0 0.0
    %1280 = vmatprep.subr.mxu0 0.0
    %1281 = vmatpush2.msra.mxu0 0.0
    %1282 = vmatprep.subr.mxu0 0.0
    %1283 = vmatpush2.msra.mxu0 0.0
    %1284 = vmatprep.mubr.f32.mxu0 0.0
    %1285 = vmatmul.mubr.f32.gmra.mxu0 %v905
    %v1286 = vpop.f32.mrf.mxu0
    %v1287 = vadd.f32 %v794, %v1286
    %v1288 = vpop.f32.mrf.mxu0
    %1289 = vdwg.mxu0
    %v1298 = vsel %vm325, %v1183, %v1177
    %v1299 = vsel %vm328, %v1189, %v1298
    %v1300 = vsel %vm331, %v1195, %v1299
    %v1301 = vsel %vm334, %v1201, %v1300
    %v1302 = vsel %vm337, %v1207, %v1301
    %v1303 = vsel %vm340, %v1213, %v1302
    %v1304 = vsel %vm343, %v1219, %v1303
    %v1306 = vadd.f32 %v1287, %v1304
    %v1307 = vmul.f32 %v1306, %v306
    %1308 = vadd.xlane.f32.xlu0 %v1307
    %v1309 = vpop.xlane.xlu0 %1308
    %v1311 = vlaneseq
    %v1312 = vshrl.u32 %v1311, 7
    %v1313 = vsub.s32 0, %v1312
    %v1314 = vrot.slane %v1309, %v1313
    %v1315 = vlaneseq
    %v1316 = vshrl.u32 %v1315, 7
    %v1317 = vsub.s32 1, %v1316
    %v1318 = vrot.slane %v1309, %v1317
    %v1319 = vlaneseq
    %v1320 = vshrl.u32 %v1319, 7
    %v1321 = vsub.s32 2, %v1320
    %v1322 = vrot.slane %v1309, %v1321
    %v1323 = vlaneseq
    %v1324 = vshrl.u32 %v1323, 7
    %v1325 = vsub.s32 3, %v1324
    %v1326 = vrot.slane %v1309, %v1325
    %v1327 = vlaneseq
    %v1328 = vshrl.u32 %v1327, 7
    %v1329 = vsub.s32 4, %v1328
    %v1330 = vrot.slane %v1309, %v1329
    %v1331 = vlaneseq
    %v1332 = vshrl.u32 %v1331, 7
    %v1333 = vsub.s32 5, %v1332
    %v1334 = vrot.slane %v1309, %v1333
    %v1335 = vlaneseq
    %v1336 = vshrl.u32 %v1335, 7
    %v1337 = vsub.s32 6, %v1336
    %v1338 = vrot.slane %v1309, %v1337
    %v1339 = vlaneseq
    %v1340 = vshrl.u32 %v1339, 7
    %v1341 = vsub.s32 7, %v1340
    %v1342 = vrot.slane %v1309, %v1341
    %v1351 = vadd.f32 %v294, %v1314
    %v1352 = vadd.f32 %v295, %v1318
    %v1353 = vadd.f32 %v296, %v1322
    %v1354 = vadd.f32 %v297, %v1326
    %v1355 = vadd.f32 %v298, %v1330
    %v1356 = vadd.f32 %v299, %v1334
    %v1357 = vadd.f32 %v300, %v1338
    %v1358 = vadd.f32 %v301, %v1342
    %v1359 = vtanh.pop %v1351
    %v1360 = vtanh.pop %v1352
    %v1361 = vtanh.pop %v1353
    %v1362 = vtanh.pop %v1354
    %v1363 = vtanh.pop %v1355
    %v1364 = vtanh.pop %v1356
    %v1365 = vtanh.pop %v1357
    %v1366 = vtanh.pop %v1358
    %v1367 = vmul.f32 %v1359, %v412
    %v1368 = vmul.f32 %v1360, %v419
    %v1369 = vmul.f32 %v1361, %v426
    %v1370 = vmul.f32 %v1362, %v433
    %v1371 = vmul.f32 %v1363, %v440
    %v1372 = vmul.f32 %v1364, %v447
    %v1373 = vmul.f32 %v1365, %v454
    %v1374 = vmul.f32 %v1366, %v461
    %v1375 = vmul.f32 %v1367, 1.442695
    %v1376 = vpow.pop %v1375
    %v1377 = vmul.f32 %v1368, 1.442695
    %v1378 = vpow.pop %v1377
    %v1379 = vmul.f32 %v1369, 1.442695
    %v1380 = vpow.pop %v1379
    %v1381 = vmul.f32 %v1370, 1.442695
    %v1382 = vpow.pop %v1381
    %v1383 = vmul.f32 %v1371, 1.442695
    %v1384 = vpow.pop %v1383
    %v1385 = vmul.f32 %v1372, 1.442695
    %v1386 = vpow.pop %v1385
    %v1387 = vmul.f32 %v1373, 1.442695
    %v1388 = vpow.pop %v1387
    %v1389 = vmul.f32 %v1374, 1.442695
    %v1390 = vpow.pop %v1389
    %v1391 = vmul.f32 %v1376, %v501
    %v1392 = vmul.f32 %v1378, %v508
    %v1393 = vmul.f32 %v1380, %v515
    %v1394 = vmul.f32 %v1382, %v522
    %v1395 = vmul.f32 %v1384, %v529
    %v1396 = vmul.f32 %v1386, %v536
    %v1397 = vmul.f32 %v1388, %v543
    %v1398 = vmul.f32 %v1390, %v550
    %1407 = vset.pattern.permute.xlu0 0
    %1408 = vperm.xlu0 %1407, %v1391
    %v1409 = vpop.permute.xlu0 %1408
    %1410 = vset.pattern.permute.xlu0 0
    %1411 = vperm.xlu0 %1410, %v1392
    %v1412 = vpop.permute.xlu0 %1411
    %1413 = vset.pattern.permute.xlu0 0
    %1414 = vperm.xlu0 %1413, %v1393
    %v1415 = vpop.permute.xlu0 %1414
    %1416 = vset.pattern.permute.xlu0 0
    %1417 = vperm.xlu0 %1416, %v1394
    %v1418 = vpop.permute.xlu0 %1417
    %1419 = vset.pattern.permute.xlu0 0
    %1420 = vperm.xlu0 %1419, %v1395
    %v1421 = vpop.permute.xlu0 %1420
    %1422 = vset.pattern.permute.xlu0 0
    %1423 = vperm.xlu0 %1422, %v1396
    %v1424 = vpop.permute.xlu0 %1423
    %1425 = vset.pattern.permute.xlu0 0
    %1426 = vperm.xlu0 %1425, %v1397
    %v1427 = vpop.permute.xlu0 %1426
    %1428 = vset.pattern.permute.xlu0 0
    %1429 = vperm.xlu0 %1428, %v1398
    %v1430 = vpop.permute.xlu0 %1429
    %v1431 = vlaneseq
    %v1432 = vshrl.u32 %v1431, 7
    %v1433 = vsub.s32 %v173, %v1432
    %v1434 = vrot.slane %v1409, %v1433
    %v1435 = vlaneseq
    %v1436 = vshrl.u32 %v1435, 7
    %v1437 = vsub.s32 %v173, %v1436
    %v1438 = vrot.slane %v1412, %v1437
    %v1439 = vlaneseq
    %v1440 = vshrl.u32 %v1439, 7
    %v1441 = vsub.s32 %v173, %v1440
    %v1442 = vrot.slane %v1415, %v1441
    %v1443 = vlaneseq
    %v1444 = vshrl.u32 %v1443, 7
    %v1445 = vsub.s32 %v173, %v1444
    %v1446 = vrot.slane %v1418, %v1445
    %v1447 = vlaneseq
    %v1448 = vshrl.u32 %v1447, 7
    %v1449 = vsub.s32 %v173, %v1448
    %v1450 = vrot.slane %v1421, %v1449
    %v1451 = vlaneseq
    %v1452 = vshrl.u32 %v1451, 7
    %v1453 = vsub.s32 %v173, %v1452
    %v1454 = vrot.slane %v1424, %v1453
    %v1455 = vlaneseq
    %v1456 = vshrl.u32 %v1455, 7
    %v1457 = vsub.s32 %v173, %v1456
    %v1458 = vrot.slane %v1427, %v1457
    %v1459 = vlaneseq
    %v1460 = vshrl.u32 %v1459, 7
    %v1461 = vsub.s32 %v173, %v1460
    %v1462 = vrot.slane %v1430, %v1461
    %v1463 = vsel %vm325, %v1438, %v1434
    %v1464 = vsel %vm328, %v1442, %v1463
    %v1465 = vsel %vm331, %v1446, %v1464
    %v1466 = vsel %vm334, %v1450, %v1465
    %v1467 = vsel %vm337, %v1454, %v1466
    %v1468 = vsel %vm340, %v1458, %v1467
    %v1469 = vsel %vm343, %v1462, %v1468
    %v1471 = vsel %vm639, %v1469, 0.0
    %1472 = vadd.xlane.f32.xlu0 %v1471
    %v1473 = vpop.xlane.xlu0 %1472
    %v1474 = vmax.f32 %v1473, 1e-20
    %v1475 = vrcp.pop %v1474
    %v1477 = vlaneseq
    %v1478 = vshrl.u32 %v1477, 7
    %v1479 = vsub.s32 0, %v1478
    %v1480 = vrot.slane %v1475, %v1479
    %v1481 = vlaneseq
    %v1482 = vshrl.u32 %v1481, 7
    %v1483 = vsub.s32 1, %v1482
    %v1484 = vrot.slane %v1475, %v1483
    %v1485 = vlaneseq
    %v1486 = vshrl.u32 %v1485, 7
    %v1487 = vsub.s32 2, %v1486
    %v1488 = vrot.slane %v1475, %v1487
    %v1489 = vlaneseq
    %v1490 = vshrl.u32 %v1489, 7
    %v1491 = vsub.s32 3, %v1490
    %v1492 = vrot.slane %v1475, %v1491
    %v1493 = vlaneseq
    %v1494 = vshrl.u32 %v1493, 7
    %v1495 = vsub.s32 4, %v1494
    %v1496 = vrot.slane %v1475, %v1495
    %v1497 = vlaneseq
    %v1498 = vshrl.u32 %v1497, 7
    %v1499 = vsub.s32 5, %v1498
    %v1500 = vrot.slane %v1475, %v1499
    %v1501 = vlaneseq
    %v1502 = vshrl.u32 %v1501, 7
    %v1503 = vsub.s32 6, %v1502
    %v1504 = vrot.slane %v1475, %v1503
    %v1505 = vlaneseq
    %v1506 = vshrl.u32 %v1505, 7
    %v1507 = vsub.s32 7, %v1506
    %v1508 = vrot.slane %v1475, %v1507
    %v1517 = vmul.f32 %v1391, %v1480
    %v1518 = vmul.f32 %v1392, %v1484
    %v1519 = vmul.f32 %v1393, %v1488
    %v1520 = vmul.f32 %v1394, %v1492
    %v1521 = vmul.f32 %v1395, %v1496
    %v1522 = vmul.f32 %v1396, %v1500
    %v1523 = vmul.f32 %v1397, %v1504
    %v1524 = vmul.f32 %v1398, %v1508
    %1526 = vset.pattern.permute.xlu0 0
    %1527 = vperm.xlu0 %1526, %v1517
    %v1528 = vpop.permute.xlu0 %1527
    %1531 = vset.pattern.permute.xlu0 0
    %1532 = vperm.xlu0 %1531, %v1518
    %v1533 = vpop.permute.xlu0 %1532
    %1536 = vset.pattern.permute.xlu0 0
    %1537 = vperm.xlu0 %1536, %v1519
    %v1538 = vpop.permute.xlu0 %1537
    %1541 = vset.pattern.permute.xlu0 0
    %1542 = vperm.xlu0 %1541, %v1520
    %v1543 = vpop.permute.xlu0 %1542
    %1546 = vset.pattern.permute.xlu0 0
    %1547 = vperm.xlu0 %1546, %v1521
    %v1548 = vpop.permute.xlu0 %1547
    %1551 = vset.pattern.permute.xlu0 0
    %1552 = vperm.xlu0 %1551, %v1522
    %v1553 = vpop.permute.xlu0 %1552
    %1556 = vset.pattern.permute.xlu0 0
    %1557 = vperm.xlu0 %1556, %v1523
    %v1558 = vpop.permute.xlu0 %1557
    %1561 = vset.pattern.permute.xlu0 0
    %1562 = vperm.xlu0 %1561, %v1524
    %v1563 = vpop.permute.xlu0 %1562
    %v1565 = vmul.f32 %v1528, %v107
    %v1566 = vmul.f32 %v1533, %v108
    %v1567 = vmul.f32 %v1538, %v109
    %v1568 = vmul.f32 %v1543, %v110
    %v1569 = vmul.f32 %v1548, %v111
    %v1570 = vmul.f32 %v1553, %v112
    %v1571 = vmul.f32 %v1558, %v113
    %v1572 = vmul.f32 %v1563, %v114
    %v1573 = vrot.slane %v1565, 4
    %v1574 = vadd.f32 %v1565, %v1573
    %v1575 = vrot.slane %v1574, 2
    %v1576 = vadd.f32 %v1574, %v1575
    %v1577 = vrot.slane %v1576, 1
    %v1578 = vadd.f32 %v1576, %v1577
    %v1579 = vrot.slane %v1566, 4
    %v1580 = vadd.f32 %v1566, %v1579
    %v1581 = vrot.slane %v1580, 2
    %v1582 = vadd.f32 %v1580, %v1581
    %v1583 = vrot.slane %v1582, 1
    %v1584 = vadd.f32 %v1582, %v1583
    %v1585 = vrot.slane %v1567, 4
    %v1586 = vadd.f32 %v1567, %v1585
    %v1587 = vrot.slane %v1586, 2
    %v1588 = vadd.f32 %v1586, %v1587
    %v1589 = vrot.slane %v1588, 1
    %v1590 = vadd.f32 %v1588, %v1589
    %v1591 = vrot.slane %v1568, 4
    %v1592 = vadd.f32 %v1568, %v1591
    %v1593 = vrot.slane %v1592, 2
    %v1594 = vadd.f32 %v1592, %v1593
    %v1595 = vrot.slane %v1594, 1
    %v1596 = vadd.f32 %v1594, %v1595
    %v1597 = vrot.slane %v1569, 4
    %v1598 = vadd.f32 %v1569, %v1597
    %v1599 = vrot.slane %v1598, 2
    %v1600 = vadd.f32 %v1598, %v1599
    %v1601 = vrot.slane %v1600, 1
    %v1602 = vadd.f32 %v1600, %v1601
    %v1603 = vrot.slane %v1570, 4
    %v1604 = vadd.f32 %v1570, %v1603
    %v1605 = vrot.slane %v1604, 2
    %v1606 = vadd.f32 %v1604, %v1605
    %v1607 = vrot.slane %v1606, 1
    %v1608 = vadd.f32 %v1606, %v1607
    %v1609 = vrot.slane %v1571, 4
    %v1610 = vadd.f32 %v1571, %v1609
    %v1611 = vrot.slane %v1610, 2
    %v1612 = vadd.f32 %v1610, %v1611
    %v1613 = vrot.slane %v1612, 1
    %v1614 = vadd.f32 %v1612, %v1613
    %v1615 = vrot.slane %v1572, 4
    %v1616 = vadd.f32 %v1572, %v1615
    %v1617 = vrot.slane %v1616, 2
    %v1618 = vadd.f32 %v1616, %v1617
    %v1619 = vrot.slane %v1618, 1
    %v1620 = vadd.f32 %v1618, %v1619
    %1621 = vmatprep.subr.mxu0 0.0
    %1622 = vmatpush1.msra.mxu0 %v153
    %1623 = vmatprep.subr.mxu0 0.0
    %1624 = vmatpush1.msra.mxu0 %v152
    %1625 = vmatprep.subr.mxu0 0.0
    %1626 = vmatpush1.msra.mxu0 %v151
    %1627 = vmatprep.subr.mxu0 0.0
    %1628 = vmatpush1.msra.mxu0 %v150
    %1629 = vmatprep.subr.mxu0 0.0
    %1630 = vmatpush1.msra.mxu0 %v149
    %1631 = vmatprep.subr.mxu0 0.0
    %1632 = vmatpush1.msra.mxu0 %v148
    %1633 = vmatprep.subr.mxu0 0.0
    %1634 = vmatpush1.msra.mxu0 %v147
    %1635 = vmatprep.subr.mxu0 0.0
    %1636 = vmatpush1.msra.mxu0 %v146
    %1637 = vmatprep.subr.mxu0 0.0
    %1638 = vmatpush1.msra.mxu0 %v145
    %1639 = vmatprep.subr.mxu0 0.0
    %1640 = vmatpush1.msra.mxu0 %v144
    %1641 = vmatprep.subr.mxu0 0.0
    %1642 = vmatpush1.msra.mxu0 %v143
    %1643 = vmatprep.subr.mxu0 0.0
    %1644 = vmatpush1.msra.mxu0 %v142
    %1645 = vmatprep.subr.mxu0 0.0
    %1646 = vmatpush1.msra.mxu0 %v141
    %1647 = vmatprep.subr.mxu0 0.0
    %1648 = vmatpush1.msra.mxu0 %v140
    %1649 = vmatprep.subr.mxu0 0.0
    %1650 = vmatpush1.msra.mxu0 %v139
    %1651 = vmatprep.subr.mxu0 0.0
    %1652 = vmatpush1.msra.mxu0 %v138
    %1653 = vmatprep.subr.mxu0 0.0
    %1654 = vmatpush2.msra.mxu0 0.0
    %1655 = vmatprep.subr.mxu0 0.0
    %1656 = vmatpush2.msra.mxu0 0.0
    %1657 = vmatprep.subr.mxu0 0.0
    %1658 = vmatpush2.msra.mxu0 0.0
    %1659 = vmatprep.subr.mxu0 0.0
    %1660 = vmatpush2.msra.mxu0 0.0
    %1661 = vmatprep.subr.mxu0 0.0
    %1662 = vmatpush2.msra.mxu0 0.0
    %1663 = vmatprep.subr.mxu0 0.0
    %1664 = vmatpush2.msra.mxu0 0.0
    %1665 = vmatprep.subr.mxu0 0.0
    %1666 = vmatpush2.msra.mxu0 0.0
    %1667 = vmatprep.subr.mxu0 0.0
    %1668 = vmatpush2.msra.mxu0 0.0
    %1669 = vmatprep.subr.mxu0 0.0
    %1670 = vmatpush2.msra.mxu0 0.0
    %1671 = vmatprep.subr.mxu0 0.0
    %1672 = vmatpush2.msra.mxu0 0.0
    %1673 = vmatprep.subr.mxu0 0.0
    %1674 = vmatpush2.msra.mxu0 0.0
    %1675 = vmatprep.subr.mxu0 0.0
    %1676 = vmatpush2.msra.mxu0 0.0
    %1677 = vmatprep.subr.mxu0 0.0
    %1678 = vmatpush2.msra.mxu0 0.0
    %1679 = vmatprep.subr.mxu0 0.0
    %1680 = vmatpush2.msra.mxu0 0.0
    %1681 = vmatprep.subr.mxu0 0.0
    %1682 = vmatpush2.msra.mxu0 0.0
    %1683 = vmatprep.subr.mxu0 0.0
    %1684 = vmatpush2.msra.mxu0 0.0
    %1685 = vmatprep.mubr.f32.mxu0 0.0
    %1686 = vmatmul.mubr.f32.gmra.mxu0 %v1306
    %v1687 = vpop.f32.mrf.mxu0
    %v1688 = vadd.f32 %v794, %v1687
    %v1689 = vpop.f32.mrf.mxu0
    %1690 = vdwg.mxu0
    %v1699 = vsel %vm325, %v1584, %v1578
    %v1700 = vsel %vm328, %v1590, %v1699
    %v1701 = vsel %vm331, %v1596, %v1700
    %v1702 = vsel %vm334, %v1602, %v1701
    %v1703 = vsel %vm337, %v1608, %v1702
    %v1704 = vsel %vm340, %v1614, %v1703
    %v1705 = vsel %vm343, %v1620, %v1704
    %v1707 = vadd.f32 %v1688, %v1705
    %v1709 = vlaneseq
    %v1710 = vshrl.u32 %v1709, 7
    %v1711 = vsub.s32 0, %v1710
    %v1712 = vrot.slane %v171, %v1711
    %1714 = vmatprep.subr.mxu0 0.0
    %1715 = vmatpush1.msra.mxu0 %v170
    %1716 = vmatprep.subr.mxu0 0.0
    %1717 = vmatpush1.msra.mxu0 %v169
    %1718 = vmatprep.subr.mxu0 0.0
    %1719 = vmatpush1.msra.mxu0 %v168
    %1720 = vmatprep.subr.mxu0 0.0
    %1721 = vmatpush1.msra.mxu0 %v167
    %1722 = vmatprep.subr.mxu0 0.0
    %1723 = vmatpush1.msra.mxu0 %v166
    %1724 = vmatprep.subr.mxu0 0.0
    %1725 = vmatpush1.msra.mxu0 %v165
    %1726 = vmatprep.subr.mxu0 0.0
    %1727 = vmatpush1.msra.mxu0 %v164
    %1728 = vmatprep.subr.mxu0 0.0
    %1729 = vmatpush1.msra.mxu0 %v163
    %1730 = vmatprep.subr.mxu0 0.0
    %1731 = vmatpush1.msra.mxu0 %v162
    %1732 = vmatprep.subr.mxu0 0.0
    %1733 = vmatpush1.msra.mxu0 %v161
    %1734 = vmatprep.subr.mxu0 0.0
    %1735 = vmatpush1.msra.mxu0 %v160
    %1736 = vmatprep.subr.mxu0 0.0
    %1737 = vmatpush1.msra.mxu0 %v159
    %1738 = vmatprep.subr.mxu0 0.0
    %1739 = vmatpush1.msra.mxu0 %v158
    %1740 = vmatprep.subr.mxu0 0.0
    %1741 = vmatpush1.msra.mxu0 %v157
    %1742 = vmatprep.subr.mxu0 0.0
    %1743 = vmatpush1.msra.mxu0 %v156
    %1744 = vmatprep.subr.mxu0 0.0
    %1745 = vmatpush1.msra.mxu0 %v155
    %1746 = vmatprep.subr.mxu0 0.0
    %1747 = vmatpush2.msra.mxu0 0.0
    %1748 = vmatprep.subr.mxu0 0.0
    %1749 = vmatpush2.msra.mxu0 0.0
    %1750 = vmatprep.subr.mxu0 0.0
    %1751 = vmatpush2.msra.mxu0 0.0
    %1752 = vmatprep.subr.mxu0 0.0
    %1753 = vmatpush2.msra.mxu0 0.0
    %1754 = vmatprep.subr.mxu0 0.0
    %1755 = vmatpush2.msra.mxu0 0.0
    %1756 = vmatprep.subr.mxu0 0.0
    %1757 = vmatpush2.msra.mxu0 0.0
    %1758 = vmatprep.subr.mxu0 0.0
    %1759 = vmatpush2.msra.mxu0 0.0
    %1760 = vmatprep.subr.mxu0 0.0
    %1761 = vmatpush2.msra.mxu0 0.0
    %1762 = vmatprep.subr.mxu0 0.0
    %1763 = vmatpush2.msra.mxu0 0.0
    %1764 = vmatprep.subr.mxu0 0.0
    %1765 = vmatpush2.msra.mxu0 0.0
    %1766 = vmatprep.subr.mxu0 0.0
    %1767 = vmatpush2.msra.mxu0 0.0
    %1768 = vmatprep.subr.mxu0 0.0
    %1769 = vmatpush2.msra.mxu0 0.0
    %1770 = vmatprep.subr.mxu0 0.0
    %1771 = vmatpush2.msra.mxu0 0.0
    %1772 = vmatprep.subr.mxu0 0.0
    %1773 = vmatpush2.msra.mxu0 0.0
    %1774 = vmatprep.subr.mxu0 0.0
    %1775 = vmatpush2.msra.mxu0 0.0
    %1776 = vmatprep.subr.mxu0 0.0
    %1777 = vmatpush2.msra.mxu0 0.0
    %1778 = vmatprep.mubr.f32.mxu0 0.0
    %1779 = vmatmul.mubr.f32.gmra.mxu0 %v1707
    %v1780 = vpop.f32.mrf.mxu0
    %v1781 = vadd.f32 %v1712, %v1780
    %v1782 = vpop.f32.mrf.mxu0
    %1783 = vdwg.mxu0
    %1784 = vst [vmem:[#allocation11] sm:$0xff] %v1781
    // Predicated region
    $region66: #{tpu_custom_call.1} parent=1 // pred_check
      _
    $region67: #{tpu_custom_call.1} parent=1 // pred_check_branch
      %1786 = sbr.rel (0) target = $region69
    $region68: #{tpu_custom_call.1} parent=1 // pred_region
      %s1788 = ssub.s32 128, 128
      %1789 = vsyncadd [#allocation5], %s1788
      %s1791 = sshll.u32 [#allocation11], 4
      %s1792 = int_to_ptr.vmem [resolvable:$true] %s1791
      %1794 = dma.vmem_to_hbm [thread:$0]  %s1792, 128, %s12, [#allocation5]
    $region69: #{tpu_custom_call.1} parent=1 // pred_fallthru
      _
    // Predicated region
    $region70: #{tpu_custom_call.1} parent=1 // pred_check
      _
    $region71: #{tpu_custom_call.1} parent=1 // pred_check_branch
      %1796 = sbr.rel (0) target = $region73
    $region72: #{tpu_custom_call.1} parent=1 // pred_region
      %1797 = dma.done [#allocation5], 128
    $region73: #{tpu_custom_call.1} parent=1 // pred_fallthru
      _
    %1798 = vsyncpa [#allocation4], 1
    %1799 = vsyncpa [#allocation7], 1
    %1800 = vsyncpa [#allocation10], 1
    %1801 = vsyncpa [#allocation5], 1

</llo_original>
